<compile_context>
chip_gen: v5e
topology: v5e:2x2
jax: 0.10.0
libtpu: 0.0.40
codegen_flags: <defaults>
</compile_context>

<pallas_src>
import functools

import jax
import jax.numpy as jnp
from jax import lax
from jax.experimental import pallas as pl
from jax.experimental.pallas import tpu as pltpu


# ----------------------------------------------------------------------------
# The single fused kernel.
# ----------------------------------------------------------------------------
def _gtn_fused_kernel(filt_ref, at_ref, x_ref, gw_ref, gb_ref, sel_ref,
                      w1_ref, b1_ref, w2_ref, b2_ref, oh_ref,
                      y_ref, loss_ref,
                      *, num_layers, num_channels, num_edge, w_out):
    Np = at_ref.shape[1]
    T = sel_ref.shape[0]

    # Hoisted diagonal mask: built ONCE, reused by every normalization.
    ri = lax.broadcasted_iota(jnp.int32, (Np, Np), 0)
    ci = lax.broadcasted_iota(jnp.int32, (Np, Np), 1)
    diag = ri == ci

    def mix(slot, c):
        # softmax(W)[slot, c, :] . A^T — E is tiny, so this is a VPU weighted
        # sum of the resident (Np,Np) adjacencies; filter scalars live in SMEM.
        row = slot * num_channels + c
        acc = filt_ref[row, 0] * at_ref[0]
        for e in range(1, num_edge):
            acc = acc + filt_ref[row, e] * at_ref[e]
        return acc

    def norm_t(G):
        # remove_self_loops + scale edge (src,dst) by 1/deg(dst).
        # In transposed space (G = H^T): zero the diagonal, scale each row by
        # the inverse of its row-sum.  Reciprocal goes to the EUP slot.
        G = jnp.where(diag, 0.0, G)
        deg = jnp.sum(G, axis=1, keepdims=True)
        inv = jnp.where(deg == 0.0, 0.0, pl.reciprocal(deg, approx=True))
        return G * inv

    bf16 = jnp.bfloat16

    # ---- layer 0: both channels' independent chains emitted interleaved ----
    Gs = []
    for c in range(num_channels):
        a1t = mix(0, c).astype(bf16)        # conv1 mixture (transposed)
        a2t = mix(1, c).astype(bf16)        # conv2 mixture (transposed)
        # G = (A1 @ A2)^T = A2^T @ A1^T ; bf16 operands, f32 accumulation.
        Gs.append(jnp.dot(a2t, a1t, preferred_element_type=jnp.float32))
    Gs = [norm_t(G) for G in Gs]

    # ---- layers 1 .. num_layers-1 -------------------------------------------
    for i in range(1, num_layers):
        nxt = []
        for c in range(num_channels):
            bt = mix(i + 1, c).astype(bf16)
            # G_new = (H @ B)^T = B^T @ G
            nxt.append(jnp.dot(bt, Gs[c].astype(bf16),
                               preferred_element_type=jnp.float32))
        Gs = [norm_t(G) for G in nxt]

    # ---- channel-invariant X @ W_gcn computed exactly ONCE ------------------
    xw = jnp.dot(x_ref[...], gw_ref[...], preferred_element_type=jnp.float32)

    # ---- per-channel GCN aggregation + ReLU; channel concat folded into W1 --
    # Row-gather of target_x commutes with all row-wise ops, so the selection
    # matmul is applied right after the GCN ReLU.
    # NOTE: padded node rows (N..Np) of the GCN output hold relu(gcn_b); they
    # are never selected because target_x < N, so no masking is required here.
    acc = jnp.zeros((T, w_out), jnp.float32)
    for c in range(num_channels):
        gc_c = jnp.maximum(
            jnp.dot(Gs[c], xw, preferred_element_type=jnp.float32) + gb_ref[...],
            0.0)
        rows = jnp.dot(sel_ref[...], gc_c, preferred_element_type=jnp.float32)
        w1_blk = w1_ref[c * w_out:(c + 1) * w_out, :]
        acc = acc + jnp.dot(rows, w1_blk, preferred_element_type=jnp.float32)

    # ---- linear1 + relu, linear2, cross-entropy (all stay in VMEM) ----------
    h1 = jnp.maximum(acc + b1_ref[...], 0.0)
    z = jnp.dot(h1, w2_ref[...], preferred_element_type=jnp.float32) + b2_ref[...]
    y_ref[...] = z                                                   # logits

    m = jnp.max(z, axis=-1, keepdims=True)
    lse = m + jnp.log(jnp.sum(jnp.exp(z - m), axis=-1, keepdims=True))
    tgt = jnp.sum(z * oh_ref[...], axis=-1, keepdims=True)
    loss_ref[...] = jnp.sum(lse - tgt, axis=0, keepdims=True) / T     # mean CE


def gtn_fused_call(filt_flat, A_T, X_pad, gcn_w, gcn_b_row, sel,
                   lin1_w, lin1_b_row, lin2_w, lin2_b_row, onehot,
                   *, num_layers, num_channels, num_edge, w_out,
                   num_class, num_targets):
    E, Np, _ = A_T.shape
    w_in = X_pad.shape[1]
    C = num_channels

    flops = int(
        C * (num_layers + 1) * num_edge * 2 * Np * Np        # GTConv mixes
        + C * num_layers * 2 * Np ** 3                        # adjacency chain
        + 2 * Np * w_in * w_out                               # X @ W (once)
        + C * 2 * Np * Np * w_out                             # GCN aggregation
        + C * 2 * num_targets * Np * w_out                    # row selection
        + C * 2 * num_targets * w_out * w_out                 # linear1 blocks
        + 2 * num_targets * w_out * num_class)                # linear2
    bytes_accessed = int(4 * (E * Np * Np + Np * w_in + w_in * w_out
                              + num_targets * Np + C * w_out * w_out
                              + w_out * num_class
                              + 2 * num_targets * num_class + 4))
    transcendentals = int(num_targets * (num_class + 1)
                          + C * num_layers * Np)

    kernel = functools.partial(
        _gtn_fused_kernel, num_layers=num_layers, num_channels=C,
        num_edge=num_edge, w_out=w_out)

    return pl.pallas_call(
        kernel,
        out_shape=(jax.ShapeDtypeStruct((num_targets, num_class), jnp.float32),
                   jax.ShapeDtypeStruct((1, 1), jnp.float32)),
        grid=(1,),
        in_specs=[
            pl.BlockSpec(memory_space=pltpu.MemorySpace.SMEM),         # filters
            pl.BlockSpec((E, Np, Np), lambda i: (0, 0, 0)),            # A^T
            pl.BlockSpec((Np, w_in), lambda i: (0, 0)),                # X (padded)
            pl.BlockSpec((w_in, w_out), lambda i: (0, 0)),             # gcn weight
            pl.BlockSpec((1, w_out), lambda i: (0, 0)),                # gcn bias
            pl.BlockSpec((num_targets, Np), lambda i: (0, 0)),         # selection
            pl.BlockSpec((C * w_out, w_out), lambda i: (0, 0)),        # lin1 w
            pl.BlockSpec((1, w_out), lambda i: (0, 0)),                # lin1 b
            pl.BlockSpec((w_out, num_class), lambda i: (0, 0)),        # lin2 w
            pl.BlockSpec((1, num_class), lambda i: (0, 0)),            # lin2 b
            pl.BlockSpec((num_targets, num_class), lambda i: (0, 0)),  # target 1hot
        ],
        out_specs=(pl.BlockSpec((num_targets, num_class), lambda i: (0, 0)),
                   pl.BlockSpec((1, 1), lambda i: (0, 0))),
        compiler_params=pltpu.CompilerParams(
            dimension_semantics=("arbitrary",)),
        cost_estimate=pl.CostEstimate(flops=flops,
                                      transcendentals=transcendentals,
                                      bytes_accessed=bytes_accessed),
    )(filt_flat, A_T, X_pad, gcn_w, gcn_b_row, sel,
      lin1_w, lin1_b_row, lin2_w, lin2_b_row, onehot)


# ----------------------------------------------------------------------------
# Per-dataset preprocessing (hoisted out of the training step).
# ----------------------------------------------------------------------------
def prepare_inputs(A, X, target_x, target, num_class):
    """Pad to the MXU-native 128 edge, move A to transposed (dst, src) space,
    and build the one-hot selection / label matrices.  Called once per dataset
    so the E x Np^2 pad + transpose is not re-launched every forward."""
    _, N, _ = A.shape
    Np = max(128, ((N + 127) // 128) * 128)
    A_pad = jnp.pad(A.astype(jnp.float32), ((0, 0), (0, Np - N), (0, Np - N)))
    A_T = jnp.transpose(A_pad, (0, 2, 1))
    X_pad = jnp.pad(X.astype(jnp.float32), ((0, Np - N), (0, 0)))
    sel = jax.nn.one_hot(target_x, Np, dtype=jnp.float32)
    onehot = jax.nn.one_hot(target, num_class, dtype=jnp.float32)
    return A_T, X_pad, sel, onehot


# ----------------------------------------------------------------------------
# Full GTN forward — thin JAX glue around the single fused Pallas kernel.
# ----------------------------------------------------------------------------
@jax.jit
def gtn_forward(params, A_T, X_pad, sel, onehot):
    E, Np, _ = A_T.shape
    C = params["conv_w"][0].shape[0]
    num_layers = len(params["conv_w"]) - 1
    w_out = params["gcn_w"].shape[1]
    num_class = onehot.shape[1]
    T = sel.shape[0]

    # GTConv filters (softmax over edge types); layer 0 owns conv1 + conv2.
    filters = [jax.nn.softmax(w, axis=1) for w in params["conv_w"]]
    Ws = [[filters[0], filters[1]]] + [[filters[i + 1]]
                                       for i in range(1, num_layers)]
    filt_flat = jnp.stack(filters).reshape((num_layers + 1) * C, E)

    y, loss = gtn_fused_call(
        filt_flat, A_T, X_pad,
        params["gcn_w"], params["gcn_b"].reshape(1, w_out), sel,
        params["lin1_w"], params["lin1_b"].reshape(1, w_out),
        params["lin2_w"], params["lin2_b"].reshape(1, num_class), onehot,
        num_layers=num_layers, num_channels=C, num_edge=E, w_out=w_out,
        num_class=num_class, num_targets=T)
    return loss[0, 0], y, Ws


if __name__ == "__main__":
    # Small, GTN-consistent shapes.
    num_edge, num_channels, num_nodes = 4, 2, 64
    w_in, w_out, num_class = 16, 16, 3
    num_layers = 2
    num_targets = 8

    key = jax.random.PRNGKey(0)
    keys = jax.random.split(key, 16)

    # Dense (sparse-ish) non-negative adjacencies per edge type.
    mask = (jax.random.uniform(keys[0], (num_edge, num_nodes, num_nodes)) < 0.15)
    vals = jax.random.uniform(keys[1], (num_edge, num_nodes, num_nodes))
    A = (mask.astype(jnp.float32) * vals).astype(jnp.float32)

    X = jax.random.normal(keys[2], (num_nodes, w_in), dtype=jnp.float32)
    target_x = jnp.arange(num_targets, dtype=jnp.int32)
    target = jax.random.randint(keys[3], (num_targets,), 0, num_class)

    # Deterministic parameter init (mirrors module __init__ shapes).
    conv_w = [0.01 * jax.random.normal(keys[4 + i], (num_channels, num_edge),
                                       dtype=jnp.float32)
              for i in range(num_layers + 1)]  # layer0: conv1+conv2; then conv1
    params = {
        "conv_w": conv_w,
        "gcn_w": jax.random.normal(keys[8], (w_in, w_out), dtype=jnp.float32)
                 / jnp.sqrt(jnp.float32(w_in)),
        "gcn_b": jnp.zeros((w_out,), jnp.float32),
        "lin1_w": jax.random.normal(keys[9], (num_channels * w_out, w_out),
                                    dtype=jnp.float32)
                  / jnp.sqrt(jnp.float32(num_channels * w_out)),
        "lin1_b": 0.01 * jax.random.normal(keys[10], (w_out,), dtype=jnp.float32),
        "lin2_w": jax.random.normal(keys[11], (w_out, num_class), dtype=jnp.float32)
                  / jnp.sqrt(jnp.float32(w_out)),
        "lin2_b": 0.01 * jax.random.normal(keys[12], (num_class,), dtype=jnp.float32),
    }

    A_T, X_pad, sel, onehot = prepare_inputs(A, X, target_x, target, num_class)
    loss, y, Ws = gtn_forward(params, A_T, X_pad, sel, onehot)
    jax.block_until_ready((loss, y))
    print("KERNEL_OK")
</pallas_src>

<mosaic_0001>
module attributes {stable_mosaic.version = 11 : i64} {
  func.func @_gtn_fused_kernel(%arg0: i32, %arg1: memref<6x4xf32, #tpu.memory_space<smem>>, %arg2: memref<4x128x128xf32, #tpu.memory_space<vmem>>, %arg3: memref<128x16xf32, #tpu.memory_space<vmem>>, %arg4: memref<16x16xf32, #tpu.memory_space<vmem>>, %arg5: memref<1x16xf32, #tpu.memory_space<vmem>>, %arg6: memref<8x128xf32, #tpu.memory_space<vmem>>, %arg7: memref<32x16xf32, #tpu.memory_space<vmem>>, %arg8: memref<1x16xf32, #tpu.memory_space<vmem>>, %arg9: memref<16x3xf32, #tpu.memory_space<vmem>>, %arg10: memref<1x3xf32, #tpu.memory_space<vmem>>, %arg11: memref<8x3xf32, #tpu.memory_space<vmem>>, %arg12: memref<8x3xf32, #tpu.memory_space<vmem>>, %arg13: memref<1x1xf32, #tpu.memory_space<vmem>>) attributes {dimension_semantics = [#tpu.dimension_semantics<arbitrary>], iteration_bounds = array<i64: 1>, scalar_prefetch = 0 : i64, scratch_operands = 0 : i64, tpu.core_type = #tpu.core_type<tc>, window_params = [{transform_indices = @transform_0, window_bounds = array<i64: 6, 4>}, {pipeline_mode = #tpu.pipeline_mode<synchronous>, transform_indices = @transform_1, window_bounds = array<i64: 4, 128, 128>}, {pipeline_mode = #tpu.pipeline_mode<synchronous>, transform_indices = @transform_2, window_bounds = array<i64: 128, 16>}, {pipeline_mode = #tpu.pipeline_mode<synchronous>, transform_indices = @transform_3, window_bounds = array<i64: 16, 16>}, {pipeline_mode = #tpu.pipeline_mode<synchronous>, transform_indices = @transform_4, window_bounds = array<i64: 1, 16>}, {pipeline_mode = #tpu.pipeline_mode<synchronous>, transform_indices = @transform_5, window_bounds = array<i64: 8, 128>}, {pipeline_mode = #tpu.pipeline_mode<synchronous>, transform_indices = @transform_6, window_bounds = array<i64: 32, 16>}, {pipeline_mode = #tpu.pipeline_mode<synchronous>, transform_indices = @transform_7, window_bounds = array<i64: 1, 16>}, {pipeline_mode = #tpu.pipeline_mode<synchronous>, transform_indices = @transform_8, window_bounds = array<i64: 16, 3>}, {pipeline_mode = #tpu.pipeline_mode<synchronous>, transform_indices = @transform_9, window_bounds = array<i64: 1, 3>}, {pipeline_mode = #tpu.pipeline_mode<synchronous>, transform_indices = @transform_10, window_bounds = array<i64: 8, 3>}, {pipeline_mode = #tpu.pipeline_mode<synchronous>, transform_indices = @transform_11, window_bounds = array<i64: 8, 3>}, {pipeline_mode = #tpu.pipeline_mode<synchronous>, transform_indices = @transform_12, window_bounds = array<i64: 1, 1>}]} {
    %0 = tpu.iota {dimensions = array<i32: 0>} : vector<128x128xi32>
    %1 = tpu.iota {dimensions = array<i32: 1>} : vector<128x128xi32>
    %2 = arith.cmpi eq, %0, %1 : vector<128x128xi32>
    %c0 = arith.constant 0 : index
    %c0_0 = arith.constant 0 : index
    %3 = memref.load %arg1[%c0, %c0_0] : memref<6x4xf32, #tpu.memory_space<smem>>
    %c0_1 = arith.constant 0 : index
    %c0_2 = arith.constant 0 : index
    %c0_3 = arith.constant 0 : index
    %4 = vector.load %arg2[%c0_1, %c0_2, %c0_3] : memref<4x128x128xf32, #tpu.memory_space<vmem>>, vector<1x128x128xf32>
    %5 = vector.shape_cast %4 : vector<1x128x128xf32> to vector<128x128xf32>
    %6 = vector.broadcast %3 : f32 to vector<128x128xf32>
    %7 = arith.mulf %6, %5 : vector<128x128xf32>
    %c0_4 = arith.constant 0 : index
    %c1 = arith.constant 1 : index
    %8 = memref.load %arg1[%c0_4, %c1] : memref<6x4xf32, #tpu.memory_space<smem>>
    %c1_5 = arith.constant 1 : index
    %c0_6 = arith.constant 0 : index
    %c0_7 = arith.constant 0 : index
    %9 = vector.load %arg2[%c1_5, %c0_6, %c0_7] : memref<4x128x128xf32, #tpu.memory_space<vmem>>, vector<1x128x128xf32>
    %10 = vector.shape_cast %9 : vector<1x128x128xf32> to vector<128x128xf32>
    %11 = vector.broadcast %8 : f32 to vector<128x128xf32>
    %12 = arith.mulf %11, %10 : vector<128x128xf32>
    %13 = arith.addf %7, %12 : vector<128x128xf32>
    %c0_8 = arith.constant 0 : index
    %c2 = arith.constant 2 : index
    %14 = memref.load %arg1[%c0_8, %c2] : memref<6x4xf32, #tpu.memory_space<smem>>
    %c2_9 = arith.constant 2 : index
    %c0_10 = arith.constant 0 : index
    %c0_11 = arith.constant 0 : index
    %15 = vector.load %arg2[%c2_9, %c0_10, %c0_11] : memref<4x128x128xf32, #tpu.memory_space<vmem>>, vector<1x128x128xf32>
    %16 = vector.shape_cast %15 : vector<1x128x128xf32> to vector<128x128xf32>
    %17 = vector.broadcast %14 : f32 to vector<128x128xf32>
    %18 = arith.mulf %17, %16 : vector<128x128xf32>
    %19 = arith.addf %13, %18 : vector<128x128xf32>
    %c0_12 = arith.constant 0 : index
    %c3 = arith.constant 3 : index
    %20 = memref.load %arg1[%c0_12, %c3] : memref<6x4xf32, #tpu.memory_space<smem>>
    %c3_13 = arith.constant 3 : index
    %c0_14 = arith.constant 0 : index
    %c0_15 = arith.constant 0 : index
    %21 = vector.load %arg2[%c3_13, %c0_14, %c0_15] : memref<4x128x128xf32, #tpu.memory_space<vmem>>, vector<1x128x128xf32>
    %22 = vector.shape_cast %21 : vector<1x128x128xf32> to vector<128x128xf32>
    %23 = vector.broadcast %20 : f32 to vector<128x128xf32>
    %24 = arith.mulf %23, %22 : vector<128x128xf32>
    %25 = arith.addf %19, %24 : vector<128x128xf32>
    %26 = arith.truncf %25 : vector<128x128xf32> to vector<128x128xbf16>
    %c2_16 = arith.constant 2 : index
    %c0_17 = arith.constant 0 : index
    %27 = memref.load %arg1[%c2_16, %c0_17] : memref<6x4xf32, #tpu.memory_space<smem>>
    %c0_18 = arith.constant 0 : index
    %c0_19 = arith.constant 0 : index
    %c0_20 = arith.constant 0 : index
    %28 = vector.load %arg2[%c0_18, %c0_19, %c0_20] : memref<4x128x128xf32, #tpu.memory_space<vmem>>, vector<1x128x128xf32>
    %29 = vector.shape_cast %28 : vector<1x128x128xf32> to vector<128x128xf32>
    %30 = vector.broadcast %27 : f32 to vector<128x128xf32>
    %31 = arith.mulf %30, %29 : vector<128x128xf32>
    %c2_21 = arith.constant 2 : index
    %c1_22 = arith.constant 1 : index
    %32 = memref.load %arg1[%c2_21, %c1_22] : memref<6x4xf32, #tpu.memory_space<smem>>
    %c1_23 = arith.constant 1 : index
    %c0_24 = arith.constant 0 : index
    %c0_25 = arith.constant 0 : index
    %33 = vector.load %arg2[%c1_23, %c0_24, %c0_25] : memref<4x128x128xf32, #tpu.memory_space<vmem>>, vector<1x128x128xf32>
    %34 = vector.shape_cast %33 : vector<1x128x128xf32> to vector<128x128xf32>
    %35 = vector.broadcast %32 : f32 to vector<128x128xf32>
    %36 = arith.mulf %35, %34 : vector<128x128xf32>
    %37 = arith.addf %31, %36 : vector<128x128xf32>
    %c2_26 = arith.constant 2 : index
    %c2_27 = arith.constant 2 : index
    %38 = memref.load %arg1[%c2_26, %c2_27] : memref<6x4xf32, #tpu.memory_space<smem>>
    %c2_28 = arith.constant 2 : index
    %c0_29 = arith.constant 0 : index
    %c0_30 = arith.constant 0 : index
    %39 = vector.load %arg2[%c2_28, %c0_29, %c0_30] : memref<4x128x128xf32, #tpu.memory_space<vmem>>, vector<1x128x128xf32>
    %40 = vector.shape_cast %39 : vector<1x128x128xf32> to vector<128x128xf32>
    %41 = vector.broadcast %38 : f32 to vector<128x128xf32>
    %42 = arith.mulf %41, %40 : vector<128x128xf32>
    %43 = arith.addf %37, %42 : vector<128x128xf32>
    %c2_31 = arith.constant 2 : index
    %c3_32 = arith.constant 3 : index
    %44 = memref.load %arg1[%c2_31, %c3_32] : memref<6x4xf32, #tpu.memory_space<smem>>
    %c3_33 = arith.constant 3 : index
    %c0_34 = arith.constant 0 : index
    %c0_35 = arith.constant 0 : index
    %45 = vector.load %arg2[%c3_33, %c0_34, %c0_35] : memref<4x128x128xf32, #tpu.memory_space<vmem>>, vector<1x128x128xf32>
    %46 = vector.shape_cast %45 : vector<1x128x128xf32> to vector<128x128xf32>
    %47 = vector.broadcast %44 : f32 to vector<128x128xf32>
    %48 = arith.mulf %47, %46 : vector<128x128xf32>
    %49 = arith.addf %43, %48 : vector<128x128xf32>
    %50 = arith.truncf %49 : vector<128x128xf32> to vector<128x128xbf16>
    %cst = arith.constant dense<0.000000e+00> : vector<128x128xf32>
    %51 = tpu.matmul %50, %26, %cst {dimension_numbers = #tpu.dot_dimension_numbers<[1], [0], [0], [1], [0, 0, 1, 1], [], []>} : vector<128x128xbf16>, vector<128x128xbf16>, vector<128x128xf32> -> vector<128x128xf32>
    %c1_36 = arith.constant 1 : index
    %c0_37 = arith.constant 0 : index
    %52 = memref.load %arg1[%c1_36, %c0_37] : memref<6x4xf32, #tpu.memory_space<smem>>
    %c0_38 = arith.constant 0 : index
    %c0_39 = arith.constant 0 : index
    %c0_40 = arith.constant 0 : index
    %53 = vector.load %arg2[%c0_38, %c0_39, %c0_40] : memref<4x128x128xf32, #tpu.memory_space<vmem>>, vector<1x128x128xf32>
    %54 = vector.shape_cast %53 : vector<1x128x128xf32> to vector<128x128xf32>
    %55 = vector.broadcast %52 : f32 to vector<128x128xf32>
    %56 = arith.mulf %55, %54 : vector<128x128xf32>
    %c1_41 = arith.constant 1 : index
    %c1_42 = arith.constant 1 : index
    %57 = memref.load %arg1[%c1_41, %c1_42] : memref<6x4xf32, #tpu.memory_space<smem>>
    %c1_43 = arith.constant 1 : index
    %c0_44 = arith.constant 0 : index
    %c0_45 = arith.constant 0 : index
    %58 = vector.load %arg2[%c1_43, %c0_44, %c0_45] : memref<4x128x128xf32, #tpu.memory_space<vmem>>, vector<1x128x128xf32>
    %59 = vector.shape_cast %58 : vector<1x128x128xf32> to vector<128x128xf32>
    %60 = vector.broadcast %57 : f32 to vector<128x128xf32>
    %61 = arith.mulf %60, %59 : vector<128x128xf32>
    %62 = arith.addf %56, %61 : vector<128x128xf32>
    %c1_46 = arith.constant 1 : index
    %c2_47 = arith.constant 2 : index
    %63 = memref.load %arg1[%c1_46, %c2_47] : memref<6x4xf32, #tpu.memory_space<smem>>
    %c2_48 = arith.constant 2 : index
    %c0_49 = arith.constant 0 : index
    %c0_50 = arith.constant 0 : index
    %64 = vector.load %arg2[%c2_48, %c0_49, %c0_50] : memref<4x128x128xf32, #tpu.memory_space<vmem>>, vector<1x128x128xf32>
    %65 = vector.shape_cast %64 : vector<1x128x128xf32> to vector<128x128xf32>
    %66 = vector.broadcast %63 : f32 to vector<128x128xf32>
    %67 = arith.mulf %66, %65 : vector<128x128xf32>
    %68 = arith.addf %62, %67 : vector<128x128xf32>
    %c1_51 = arith.constant 1 : index
    %c3_52 = arith.constant 3 : index
    %69 = memref.load %arg1[%c1_51, %c3_52] : memref<6x4xf32, #tpu.memory_space<smem>>
    %c3_53 = arith.constant 3 : index
    %c0_54 = arith.constant 0 : index
    %c0_55 = arith.constant 0 : index
    %70 = vector.load %arg2[%c3_53, %c0_54, %c0_55] : memref<4x128x128xf32, #tpu.memory_space<vmem>>, vector<1x128x128xf32>
    %71 = vector.shape_cast %70 : vector<1x128x128xf32> to vector<128x128xf32>
    %72 = vector.broadcast %69 : f32 to vector<128x128xf32>
    %73 = arith.mulf %72, %71 : vector<128x128xf32>
    %74 = arith.addf %68, %73 : vector<128x128xf32>
    %75 = arith.truncf %74 : vector<128x128xf32> to vector<128x128xbf16>
    %c3_56 = arith.constant 3 : index
    %c0_57 = arith.constant 0 : index
    %76 = memref.load %arg1[%c3_56, %c0_57] : memref<6x4xf32, #tpu.memory_space<smem>>
    %c0_58 = arith.constant 0 : index
    %c0_59 = arith.constant 0 : index
    %c0_60 = arith.constant 0 : index
    %77 = vector.load %arg2[%c0_58, %c0_59, %c0_60] : memref<4x128x128xf32, #tpu.memory_space<vmem>>, vector<1x128x128xf32>
    %78 = vector.shape_cast %77 : vector<1x128x128xf32> to vector<128x128xf32>
    %79 = vector.broadcast %76 : f32 to vector<128x128xf32>
    %80 = arith.mulf %79, %78 : vector<128x128xf32>
    %c3_61 = arith.constant 3 : index
    %c1_62 = arith.constant 1 : index
    %81 = memref.load %arg1[%c3_61, %c1_62] : memref<6x4xf32, #tpu.memory_space<smem>>
    %c1_63 = arith.constant 1 : index
    %c0_64 = arith.constant 0 : index
    %c0_65 = arith.constant 0 : index
    %82 = vector.load %arg2[%c1_63, %c0_64, %c0_65] : memref<4x128x128xf32, #tpu.memory_space<vmem>>, vector<1x128x128xf32>
    %83 = vector.shape_cast %82 : vector<1x128x128xf32> to vector<128x128xf32>
    %84 = vector.broadcast %81 : f32 to vector<128x128xf32>
    %85 = arith.mulf %84, %83 : vector<128x128xf32>
    %86 = arith.addf %80, %85 : vector<128x128xf32>
    %c3_66 = arith.constant 3 : index
    %c2_67 = arith.constant 2 : index
    %87 = memref.load %arg1[%c3_66, %c2_67] : memref<6x4xf32, #tpu.memory_space<smem>>
    %c2_68 = arith.constant 2 : index
    %c0_69 = arith.constant 0 : index
    %c0_70 = arith.constant 0 : index
    %88 = vector.load %arg2[%c2_68, %c0_69, %c0_70] : memref<4x128x128xf32, #tpu.memory_space<vmem>>, vector<1x128x128xf32>
    %89 = vector.shape_cast %88 : vector<1x128x128xf32> to vector<128x128xf32>
    %90 = vector.broadcast %87 : f32 to vector<128x128xf32>
    %91 = arith.mulf %90, %89 : vector<128x128xf32>
    %92 = arith.addf %86, %91 : vector<128x128xf32>
    %c3_71 = arith.constant 3 : index
    %c3_72 = arith.constant 3 : index
    %93 = memref.load %arg1[%c3_71, %c3_72] : memref<6x4xf32, #tpu.memory_space<smem>>
    %c3_73 = arith.constant 3 : index
    %c0_74 = arith.constant 0 : index
    %c0_75 = arith.constant 0 : index
    %94 = vector.load %arg2[%c3_73, %c0_74, %c0_75] : memref<4x128x128xf32, #tpu.memory_space<vmem>>, vector<1x128x128xf32>
    %95 = vector.shape_cast %94 : vector<1x128x128xf32> to vector<128x128xf32>
    %96 = vector.broadcast %93 : f32 to vector<128x128xf32>
    %97 = arith.mulf %96, %95 : vector<128x128xf32>
    %98 = arith.addf %92, %97 : vector<128x128xf32>
    %99 = arith.truncf %98 : vector<128x128xf32> to vector<128x128xbf16>
    %cst_76 = arith.constant dense<0.000000e+00> : vector<128x128xf32>
    %100 = tpu.matmul %99, %75, %cst_76 {dimension_numbers = #tpu.dot_dimension_numbers<[1], [0], [0], [1], [0, 0, 1, 1], [], []>} : vector<128x128xbf16>, vector<128x128xbf16>, vector<128x128xf32> -> vector<128x128xf32>
    %cst_77 = arith.constant 0.000000e+00 : f32
    %101 = vector.broadcast %cst_77 : f32 to vector<128x128xf32>
    %102 = arith.select %2, %101, %51 : vector<128x128xi1>, vector<128x128xf32>
    %cst_78 = arith.constant dense<0.000000e+00> : vector<128xf32>
    %103 = vector.multi_reduction <add>, %102, %cst_78 [1] : vector<128x128xf32> to vector<128xf32>
    %104 = vector.shape_cast %103 : vector<128xf32> to vector<128x1xf32>
    %cst_79 = arith.constant 0.000000e+00 : f32
    %105 = vector.broadcast %cst_79 : f32 to vector<128x1xf32>
    %106 = arith.cmpf oeq, %104, %105 : vector<128x1xf32>
    %107 = tpu.reciprocal %104 {approx = true} : vector<128x1xf32> -> vector<128x1xf32>
    %cst_80 = arith.constant 0.000000e+00 : f32
    %108 = vector.broadcast %cst_80 : f32 to vector<128x1xf32>
    %109 = arith.select %106, %108, %107 : vector<128x1xi1>, vector<128x1xf32>
    %110 = vector.broadcast %109 : vector<128x1xf32> to vector<128x128xf32>
    %111 = arith.mulf %102, %110 : vector<128x128xf32>
    %cst_81 = arith.constant 0.000000e+00 : f32
    %112 = vector.broadcast %cst_81 : f32 to vector<128x128xf32>
    %113 = arith.select %2, %112, %100 : vector<128x128xi1>, vector<128x128xf32>
    %cst_82 = arith.constant dense<0.000000e+00> : vector<128xf32>
    %114 = vector.multi_reduction <add>, %113, %cst_82 [1] : vector<128x128xf32> to vector<128xf32>
    %115 = vector.shape_cast %114 : vector<128xf32> to vector<128x1xf32>
    %cst_83 = arith.constant 0.000000e+00 : f32
    %116 = vector.broadcast %cst_83 : f32 to vector<128x1xf32>
    %117 = arith.cmpf oeq, %115, %116 : vector<128x1xf32>
    %118 = tpu.reciprocal %115 {approx = true} : vector<128x1xf32> -> vector<128x1xf32>
    %cst_84 = arith.constant 0.000000e+00 : f32
    %119 = vector.broadcast %cst_84 : f32 to vector<128x1xf32>
    %120 = arith.select %117, %119, %118 : vector<128x1xi1>, vector<128x1xf32>
    %121 = vector.broadcast %120 : vector<128x1xf32> to vector<128x128xf32>
    %122 = arith.mulf %113, %121 : vector<128x128xf32>
    %c4 = arith.constant 4 : index
    %c0_85 = arith.constant 0 : index
    %123 = memref.load %arg1[%c4, %c0_85] : memref<6x4xf32, #tpu.memory_space<smem>>
    %c0_86 = arith.constant 0 : index
    %c0_87 = arith.constant 0 : index
    %c0_88 = arith.constant 0 : index
    %124 = vector.load %arg2[%c0_86, %c0_87, %c0_88] : memref<4x128x128xf32, #tpu.memory_space<vmem>>, vector<1x128x128xf32>
    %125 = vector.shape_cast %124 : vector<1x128x128xf32> to vector<128x128xf32>
    %126 = vector.broadcast %123 : f32 to vector<128x128xf32>
    %127 = arith.mulf %126, %125 : vector<128x128xf32>
    %c4_89 = arith.constant 4 : index
    %c1_90 = arith.constant 1 : index
    %128 = memref.load %arg1[%c4_89, %c1_90] : memref<6x4xf32, #tpu.memory_space<smem>>
    %c1_91 = arith.constant 1 : index
    %c0_92 = arith.constant 0 : index
    %c0_93 = arith.constant 0 : index
    %129 = vector.load %arg2[%c1_91, %c0_92, %c0_93] : memref<4x128x128xf32, #tpu.memory_space<vmem>>, vector<1x128x128xf32>
    %130 = vector.shape_cast %129 : vector<1x128x128xf32> to vector<128x128xf32>
    %131 = vector.broadcast %128 : f32 to vector<128x128xf32>
    %132 = arith.mulf %131, %130 : vector<128x128xf32>
    %133 = arith.addf %127, %132 : vector<128x128xf32>
    %c4_94 = arith.constant 4 : index
    %c2_95 = arith.constant 2 : index
    %134 = memref.load %arg1[%c4_94, %c2_95] : memref<6x4xf32, #tpu.memory_space<smem>>
    %c2_96 = arith.constant 2 : index
    %c0_97 = arith.constant 0 : index
    %c0_98 = arith.constant 0 : index
    %135 = vector.load %arg2[%c2_96, %c0_97, %c0_98] : memref<4x128x128xf32, #tpu.memory_space<vmem>>, vector<1x128x128xf32>
    %136 = vector.shape_cast %135 : vector<1x128x128xf32> to vector<128x128xf32>
    %137 = vector.broadcast %134 : f32 to vector<128x128xf32>
    %138 = arith.mulf %137, %136 : vector<128x128xf32>
    %139 = arith.addf %133, %138 : vector<128x128xf32>
    %c4_99 = arith.constant 4 : index
    %c3_100 = arith.constant 3 : index
    %140 = memref.load %arg1[%c4_99, %c3_100] : memref<6x4xf32, #tpu.memory_space<smem>>
    %c3_101 = arith.constant 3 : index
    %c0_102 = arith.constant 0 : index
    %c0_103 = arith.constant 0 : index
    %141 = vector.load %arg2[%c3_101, %c0_102, %c0_103] : memref<4x128x128xf32, #tpu.memory_space<vmem>>, vector<1x128x128xf32>
    %142 = vector.shape_cast %141 : vector<1x128x128xf32> to vector<128x128xf32>
    %143 = vector.broadcast %140 : f32 to vector<128x128xf32>
    %144 = arith.mulf %143, %142 : vector<128x128xf32>
    %145 = arith.addf %139, %144 : vector<128x128xf32>
    %146 = arith.truncf %145 : vector<128x128xf32> to vector<128x128xbf16>
    %147 = arith.truncf %111 : vector<128x128xf32> to vector<128x128xbf16>
    %cst_104 = arith.constant dense<0.000000e+00> : vector<128x128xf32>
    %148 = tpu.matmul %146, %147, %cst_104 {dimension_numbers = #tpu.dot_dimension_numbers<[1], [0], [0], [1], [0, 0, 1, 1], [], []>} : vector<128x128xbf16>, vector<128x128xbf16>, vector<128x128xf32> -> vector<128x128xf32>
    %c5 = arith.constant 5 : index
    %c0_105 = arith.constant 0 : index
    %149 = memref.load %arg1[%c5, %c0_105] : memref<6x4xf32, #tpu.memory_space<smem>>
    %c0_106 = arith.constant 0 : index
    %c0_107 = arith.constant 0 : index
    %c0_108 = arith.constant 0 : index
    %150 = vector.load %arg2[%c0_106, %c0_107, %c0_108] : memref<4x128x128xf32, #tpu.memory_space<vmem>>, vector<1x128x128xf32>
    %151 = vector.shape_cast %150 : vector<1x128x128xf32> to vector<128x128xf32>
    %152 = vector.broadcast %149 : f32 to vector<128x128xf32>
    %153 = arith.mulf %152, %151 : vector<128x128xf32>
    %c5_109 = arith.constant 5 : index
    %c1_110 = arith.constant 1 : index
    %154 = memref.load %arg1[%c5_109, %c1_110] : memref<6x4xf32, #tpu.memory_space<smem>>
    %c1_111 = arith.constant 1 : index
    %c0_112 = arith.constant 0 : index
    %c0_113 = arith.constant 0 : index
    %155 = vector.load %arg2[%c1_111, %c0_112, %c0_113] : memref<4x128x128xf32, #tpu.memory_space<vmem>>, vector<1x128x128xf32>
    %156 = vector.shape_cast %155 : vector<1x128x128xf32> to vector<128x128xf32>
    %157 = vector.broadcast %154 : f32 to vector<128x128xf32>
    %158 = arith.mulf %157, %156 : vector<128x128xf32>
    %159 = arith.addf %153, %158 : vector<128x128xf32>
    %c5_114 = arith.constant 5 : index
    %c2_115 = arith.constant 2 : index
    %160 = memref.load %arg1[%c5_114, %c2_115] : memref<6x4xf32, #tpu.memory_space<smem>>
    %c2_116 = arith.constant 2 : index
    %c0_117 = arith.constant 0 : index
    %c0_118 = arith.constant 0 : index
    %161 = vector.load %arg2[%c2_116, %c0_117, %c0_118] : memref<4x128x128xf32, #tpu.memory_space<vmem>>, vector<1x128x128xf32>
    %162 = vector.shape_cast %161 : vector<1x128x128xf32> to vector<128x128xf32>
    %163 = vector.broadcast %160 : f32 to vector<128x128xf32>
    %164 = arith.mulf %163, %162 : vector<128x128xf32>
    %165 = arith.addf %159, %164 : vector<128x128xf32>
    %c5_119 = arith.constant 5 : index
    %c3_120 = arith.constant 3 : index
    %166 = memref.load %arg1[%c5_119, %c3_120] : memref<6x4xf32, #tpu.memory_space<smem>>
    %c3_121 = arith.constant 3 : index
    %c0_122 = arith.constant 0 : index
    %c0_123 = arith.constant 0 : index
    %167 = vector.load %arg2[%c3_121, %c0_122, %c0_123] : memref<4x128x128xf32, #tpu.memory_space<vmem>>, vector<1x128x128xf32>
    %168 = vector.shape_cast %167 : vector<1x128x128xf32> to vector<128x128xf32>
    %169 = vector.broadcast %166 : f32 to vector<128x128xf32>
    %170 = arith.mulf %169, %168 : vector<128x128xf32>
    %171 = arith.addf %165, %170 : vector<128x128xf32>
    %172 = arith.truncf %171 : vector<128x128xf32> to vector<128x128xbf16>
    %173 = arith.truncf %122 : vector<128x128xf32> to vector<128x128xbf16>
    %cst_124 = arith.constant dense<0.000000e+00> : vector<128x128xf32>
    %174 = tpu.matmul %172, %173, %cst_124 {dimension_numbers = #tpu.dot_dimension_numbers<[1], [0], [0], [1], [0, 0, 1, 1], [], []>} : vector<128x128xbf16>, vector<128x128xbf16>, vector<128x128xf32> -> vector<128x128xf32>
    %cst_125 = arith.constant 0.000000e+00 : f32
    %175 = vector.broadcast %cst_125 : f32 to vector<128x128xf32>
    %176 = arith.select %2, %175, %148 : vector<128x128xi1>, vector<128x128xf32>
    %cst_126 = arith.constant dense<0.000000e+00> : vector<128xf32>
    %177 = vector.multi_reduction <add>, %176, %cst_126 [1] : vector<128x128xf32> to vector<128xf32>
    %178 = vector.shape_cast %177 : vector<128xf32> to vector<128x1xf32>
    %cst_127 = arith.constant 0.000000e+00 : f32
    %179 = vector.broadcast %cst_127 : f32 to vector<128x1xf32>
    %180 = arith.cmpf oeq, %178, %179 : vector<128x1xf32>
    %181 = tpu.reciprocal %178 {approx = true} : vector<128x1xf32> -> vector<128x1xf32>
    %cst_128 = arith.constant 0.000000e+00 : f32
    %182 = vector.broadcast %cst_128 : f32 to vector<128x1xf32>
    %183 = arith.select %180, %182, %181 : vector<128x1xi1>, vector<128x1xf32>
    %184 = vector.broadcast %183 : vector<128x1xf32> to vector<128x128xf32>
    %185 = arith.mulf %176, %184 : vector<128x128xf32>
    %cst_129 = arith.constant 0.000000e+00 : f32
    %186 = vector.broadcast %cst_129 : f32 to vector<128x128xf32>
    %187 = arith.select %2, %186, %174 : vector<128x128xi1>, vector<128x128xf32>
    %cst_130 = arith.constant dense<0.000000e+00> : vector<128xf32>
    %188 = vector.multi_reduction <add>, %187, %cst_130 [1] : vector<128x128xf32> to vector<128xf32>
    %189 = vector.shape_cast %188 : vector<128xf32> to vector<128x1xf32>
    %cst_131 = arith.constant 0.000000e+00 : f32
    %190 = vector.broadcast %cst_131 : f32 to vector<128x1xf32>
    %191 = arith.cmpf oeq, %189, %190 : vector<128x1xf32>
    %192 = tpu.reciprocal %189 {approx = true} : vector<128x1xf32> -> vector<128x1xf32>
    %cst_132 = arith.constant 0.000000e+00 : f32
    %193 = vector.broadcast %cst_132 : f32 to vector<128x1xf32>
    %194 = arith.select %191, %193, %192 : vector<128x1xi1>, vector<128x1xf32>
    %195 = vector.broadcast %194 : vector<128x1xf32> to vector<128x128xf32>
    %196 = arith.mulf %187, %195 : vector<128x128xf32>
    %c0_133 = arith.constant 0 : index
    %c0_134 = arith.constant 0 : index
    %197 = vector.load %arg3[%c0_133, %c0_134] : memref<128x16xf32, #tpu.memory_space<vmem>>, vector<128x16xf32>
    %c0_135 = arith.constant 0 : index
    %c0_136 = arith.constant 0 : index
    %198 = vector.load %arg4[%c0_135, %c0_136] : memref<16x16xf32, #tpu.memory_space<vmem>>, vector<16x16xf32>
    %cst_137 = arith.constant dense<0.000000e+00> : vector<128x16xf32>
    %199 = tpu.matmul %197, %198, %cst_137 {dimension_numbers = #tpu.dot_dimension_numbers<[1], [0], [0], [1], [0, 0, 1, 1], [], []>} : vector<128x16xf32>, vector<16x16xf32>, vector<128x16xf32> -> vector<128x16xf32>
    %cst_138 = arith.constant 0.000000e+00 : f32
    %200 = vector.broadcast %cst_138 : f32 to vector<8x16xf32>
    %cst_139 = arith.constant dense<0.000000e+00> : vector<128x16xf32>
    %201 = tpu.matmul %185, %199, %cst_139 {dimension_numbers = #tpu.dot_dimension_numbers<[1], [0], [0], [1], [0, 0, 1, 1], [], []>} : vector<128x128xf32>, vector<128x16xf32>, vector<128x16xf32> -> vector<128x16xf32>
    %c0_140 = arith.constant 0 : index
    %c0_141 = arith.constant 0 : index
    %202 = vector.load %arg5[%c0_140, %c0_141] : memref<1x16xf32, #tpu.memory_space<vmem>>, vector<1x16xf32>
    %203 = vector.broadcast %202 : vector<1x16xf32> to vector<128x16xf32>
    %204 = arith.addf %201, %203 : vector<128x16xf32>
    %cst_142 = arith.constant 0.000000e+00 : f32
    %205 = vector.broadcast %cst_142 : f32 to vector<128x16xf32>
    %206 = arith.maximumf %204, %205 : vector<128x16xf32>
    %c0_143 = arith.constant 0 : index
    %c0_144 = arith.constant 0 : index
    %207 = vector.load %arg6[%c0_143, %c0_144] : memref<8x128xf32, #tpu.memory_space<vmem>>, vector<8x128xf32>
    %cst_145 = arith.constant dense<0.000000e+00> : vector<8x16xf32>
    %208 = tpu.matmul %207, %206, %cst_145 {dimension_numbers = #tpu.dot_dimension_numbers<[1], [0], [0], [1], [0, 0, 1, 1], [], []>} : vector<8x128xf32>, vector<128x16xf32>, vector<8x16xf32> -> vector<8x16xf32>
    %c0_146 = arith.constant 0 : index
    %c0_147 = arith.constant 0 : index
    %209 = vector.load %arg7[%c0_146, %c0_147] : memref<32x16xf32, #tpu.memory_space<vmem>>, vector<16x16xf32>
    %cst_148 = arith.constant dense<0.000000e+00> : vector<8x16xf32>
    %210 = tpu.matmul %208, %209, %cst_148 {dimension_numbers = #tpu.dot_dimension_numbers<[1], [0], [0], [1], [0, 0, 1, 1], [], []>} : vector<8x16xf32>, vector<16x16xf32>, vector<8x16xf32> -> vector<8x16xf32>
    %211 = arith.addf %200, %210 : vector<8x16xf32>
    %cst_149 = arith.constant dense<0.000000e+00> : vector<128x16xf32>
    %212 = tpu.matmul %196, %199, %cst_149 {dimension_numbers = #tpu.dot_dimension_numbers<[1], [0], [0], [1], [0, 0, 1, 1], [], []>} : vector<128x128xf32>, vector<128x16xf32>, vector<128x16xf32> -> vector<128x16xf32>
    %c0_150 = arith.constant 0 : index
    %c0_151 = arith.constant 0 : index
    %213 = vector.load %arg5[%c0_150, %c0_151] : memref<1x16xf32, #tpu.memory_space<vmem>>, vector<1x16xf32>
    %214 = vector.broadcast %213 : vector<1x16xf32> to vector<128x16xf32>
    %215 = arith.addf %212, %214 : vector<128x16xf32>
    %cst_152 = arith.constant 0.000000e+00 : f32
    %216 = vector.broadcast %cst_152 : f32 to vector<128x16xf32>
    %217 = arith.maximumf %215, %216 : vector<128x16xf32>
    %c0_153 = arith.constant 0 : index
    %c0_154 = arith.constant 0 : index
    %218 = vector.load %arg6[%c0_153, %c0_154] : memref<8x128xf32, #tpu.memory_space<vmem>>, vector<8x128xf32>
    %cst_155 = arith.constant dense<0.000000e+00> : vector<8x16xf32>
    %219 = tpu.matmul %218, %217, %cst_155 {dimension_numbers = #tpu.dot_dimension_numbers<[1], [0], [0], [1], [0, 0, 1, 1], [], []>} : vector<8x128xf32>, vector<128x16xf32>, vector<8x16xf32> -> vector<8x16xf32>
    %c16 = arith.constant 16 : index
    %c0_156 = arith.constant 0 : index
    %220 = vector.load %arg7[%c16, %c0_156] : memref<32x16xf32, #tpu.memory_space<vmem>>, vector<16x16xf32>
    %cst_157 = arith.constant dense<0.000000e+00> : vector<8x16xf32>
    %221 = tpu.matmul %219, %220, %cst_157 {dimension_numbers = #tpu.dot_dimension_numbers<[1], [0], [0], [1], [0, 0, 1, 1], [], []>} : vector<8x16xf32>, vector<16x16xf32>, vector<8x16xf32> -> vector<8x16xf32>
    %222 = arith.addf %211, %221 : vector<8x16xf32>
    %c0_158 = arith.constant 0 : index
    %c0_159 = arith.constant 0 : index
    %223 = vector.load %arg8[%c0_158, %c0_159] : memref<1x16xf32, #tpu.memory_space<vmem>>, vector<1x16xf32>
    %224 = vector.broadcast %223 : vector<1x16xf32> to vector<8x16xf32>
    %225 = arith.addf %222, %224 : vector<8x16xf32>
    %cst_160 = arith.constant 0.000000e+00 : f32
    %226 = vector.broadcast %cst_160 : f32 to vector<8x16xf32>
    %227 = arith.maximumf %225, %226 : vector<8x16xf32>
    %c0_161 = arith.constant 0 : index
    %c0_162 = arith.constant 0 : index
    %228 = vector.load %arg9[%c0_161, %c0_162] : memref<16x3xf32, #tpu.memory_space<vmem>>, vector<16x3xf32>
    %cst_163 = arith.constant dense<0.000000e+00> : vector<8x3xf32>
    %229 = tpu.matmul %227, %228, %cst_163 {dimension_numbers = #tpu.dot_dimension_numbers<[1], [0], [0], [1], [0, 0, 1, 1], [], []>} : vector<8x16xf32>, vector<16x3xf32>, vector<8x3xf32> -> vector<8x3xf32>
    %c0_164 = arith.constant 0 : index
    %c0_165 = arith.constant 0 : index
    %230 = vector.load %arg10[%c0_164, %c0_165] : memref<1x3xf32, #tpu.memory_space<vmem>>, vector<1x3xf32>
    %231 = vector.broadcast %230 : vector<1x3xf32> to vector<8x3xf32>
    %232 = arith.addf %229, %231 : vector<8x3xf32>
    %c0_166 = arith.constant 0 : index
    %c0_167 = arith.constant 0 : index
    %233 = vector.load %arg12[%c0_166, %c0_167] : memref<8x3xf32, #tpu.memory_space<vmem>>, vector<8x3xf32>
    tpu.vector_store %arg12[%c0_166, %c0_167], %232 {strides = array<i32>} : memref<8x3xf32, #tpu.memory_space<vmem>>, vector<8x3xf32>,
    %cst_168 = arith.constant dense<0xFF800000> : vector<8xf32>
    %234 = vector.multi_reduction <maximumf>, %232, %cst_168 [1] : vector<8x3xf32> to vector<8xf32>
    %235 = vector.shape_cast %234 : vector<8xf32> to vector<8x1xf32>
    %236 = vector.broadcast %235 : vector<8x1xf32> to vector<8x3xf32>
    %237 = arith.subf %232, %236 : vector<8x3xf32>
    %238 = math.exp %237 : vector<8x3xf32>
    %cst_169 = arith.constant dense<0.000000e+00> : vector<8xf32>
    %239 = vector.multi_reduction <add>, %238, %cst_169 [1] : vector<8x3xf32> to vector<8xf32>
    %240 = vector.shape_cast %239 : vector<8xf32> to vector<8x1xf32>
    %241 = math.log %240 : vector<8x1xf32>
    %242 = arith.addf %235, %241 : vector<8x1xf32>
    %c0_170 = arith.constant 0 : index
    %c0_171 = arith.constant 0 : index
    %243 = vector.load %arg11[%c0_170, %c0_171] : memref<8x3xf32, #tpu.memory_space<vmem>>, vector<8x3xf32>
    %244 = arith.mulf %232, %243 : vector<8x3xf32>
    %cst_172 = arith.constant dense<0.000000e+00> : vector<8xf32>
    %245 = vector.multi_reduction <add>, %244, %cst_172 [1] : vector<8x3xf32> to vector<8xf32>
    %246 = vector.shape_cast %245 : vector<8xf32> to vector<8x1xf32>
    %247 = arith.subf %242, %246 : vector<8x1xf32>
    %cst_173 = arith.constant dense<0.000000e+00> : vector<1xf32>
    %248 = vector.multi_reduction <add>, %247, %cst_173 [0] : vector<8x1xf32> to vector<1xf32>
    %249 = vector.shape_cast %248 : vector<1xf32> to vector<1x1xf32>
    %cst_174 = arith.constant 8.000000e+00 : f32
    %250 = vector.broadcast %cst_174 : f32 to vector<1x1xf32>
    %251 = arith.divf %249, %250 : vector<1x1xf32>
    %c0_175 = arith.constant 0 : index
    %c0_176 = arith.constant 0 : index
    %252 = vector.load %arg13[%c0_175, %c0_176] : memref<1x1xf32, #tpu.memory_space<vmem>>, vector<1x1xf32>
    tpu.vector_store %arg13[%c0_175, %c0_176], %251 {strides = array<i32>} : memref<1x1xf32, #tpu.memory_space<vmem>>, vector<1x1xf32>,
    return
  }
  func.func @transform_0(%arg0: i32) -> (i32, i32) {
    %c0_i32 = arith.constant 0 : i32
    %c0_i32_0 = arith.constant 0 : i32
    %c0_i32_1 = arith.constant 0 : i32
    return %c0_i32, %c0_i32_0 : i32, i32
  }
  func.func @transform_1(%arg0: i32) -> (i32, i32, i32) {
    %c0_i32 = arith.constant 0 : i32
    %c0_i32_0 = arith.constant 0 : i32
    %c0_i32_1 = arith.constant 0 : i32
    %c0_i32_2 = arith.constant 0 : i32
    return %c0_i32, %c0_i32_0, %c0_i32_1 : i32, i32, i32
  }
  func.func @transform_2(%arg0: i32) -> (i32, i32) {
    %c0_i32 = arith.constant 0 : i32
    %c0_i32_0 = arith.constant 0 : i32
    %c0_i32_1 = arith.constant 0 : i32
    return %c0_i32, %c0_i32_0 : i32, i32
  }
  func.func @transform_3(%arg0: i32) -> (i32, i32) {
    %c0_i32 = arith.constant 0 : i32
    %c0_i32_0 = arith.constant 0 : i32
    %c0_i32_1 = arith.constant 0 : i32
    return %c0_i32, %c0_i32_0 : i32, i32
  }
  func.func @transform_4(%arg0: i32) -> (i32, i32) {
    %c0_i32 = arith.constant 0 : i32
    %c0_i32_0 = arith.constant 0 : i32
    %c0_i32_1 = arith.constant 0 : i32
    return %c0_i32, %c0_i32_0 : i32, i32
  }
  func.func @transform_5(%arg0: i32) -> (i32, i32) {
    %c0_i32 = arith.constant 0 : i32
    %c0_i32_0 = arith.constant 0 : i32
    %c0_i32_1 = arith.constant 0 : i32
    return %c0_i32, %c0_i32_0 : i32, i32
  }
  func.func @transform_6(%arg0: i32) -> (i32, i32) {
    %c0_i32 = arith.constant 0 : i32
    %c0_i32_0 = arith.constant 0 : i32
    %c0_i32_1 = arith.constant 0 : i32
    return %c0_i32, %c0_i32_0 : i32, i32
  }
  func.func @transform_7(%arg0: i32) -> (i32, i32) {
    %c0_i32 = arith.constant 0 : i32
    %c0_i32_0 = arith.constant 0 : i32
    %c0_i32_1 = arith.constant 0 : i32
    return %c0_i32, %c0_i32_0 : i32, i32
  }
  func.func @transform_8(%arg0: i32) -> (i32, i32) {
    %c0_i32 = arith.constant 0 : i32
    %c0_i32_0 = arith.constant 0 : i32
    %c0_i32_1 = arith.constant 0 : i32
    return %c0_i32, %c0_i32_0 : i32, i32
  }
  func.func @transform_9(%arg0: i32) -> (i32, i32) {
    %c0_i32 = arith.constant 0 : i32
    %c0_i32_0 = arith.constant 0 : i32
    %c0_i32_1 = arith.constant 0 : i32
    return %c0_i32, %c0_i32_0 : i32, i32
  }
  func.func @transform_10(%arg0: i32) -> (i32, i32) {
    %c0_i32 = arith.constant 0 : i32
    %c0_i32_0 = arith.constant 0 : i32
    %c0_i32_1 = arith.constant 0 : i32
    return %c0_i32, %c0_i32_0 : i32, i32
  }
  func.func @transform_11(%arg0: i32) -> (i32, i32) {
    %c0_i32 = arith.constant 0 : i32
    %c0_i32_0 = arith.constant 0 : i32
    %c0_i32_1 = arith.constant 0 : i32
    return %c0_i32, %c0_i32_0 : i32, i32
  }
  func.func @transform_12(%arg0: i32) -> (i32, i32) {
    %c0_i32 = arith.constant 0 : i32
    %c0_i32_0 = arith.constant 0 : i32
    %c0_i32_1 = arith.constant 0 : i32
    return %c0_i32, %c0_i32_0 : i32, i32
  }
}

</mosaic_0001>

<llo_original>
// kernel: gtn_forward.1
$region0: #{gtn_forward.1}
  #allocation0 [shape = 'u32[]', space=smem, size = 0x4, offset = 0x4, fixed_abs, tag = 'smem constant byte address 0x4 - core index']
  #allocation1 [shape = 'u32[72,128]{1,0:T(1,128)}', space=vmem, size = 0x9000, scoped, tag = 'internal scratch']
  %s0 = inlined_call_operand.vmem [shape: f32[6,4], index: 0, kind: input, shape index: {}]
  %s1 = inlined_call_operand.hbm [shape: f32[4,128,128], index: 1, kind: input, shape index: {}]
  %s2 = inlined_call_operand.vmem [shape: f32[128,16], index: 2, kind: input, shape index: {}]
  %s3 = inlined_call_operand.vmem [shape: f32[16,16], index: 3, kind: input, shape index: {}]
  %s4 = inlined_call_operand.vmem [shape: f32[1,16], index: 4, kind: input, shape index: {}]
  %s5 = inlined_call_operand.vmem [shape: f32[8,128], index: 5, kind: input, shape index: {}]
  %s6 = inlined_call_operand.vmem [shape: f32[32,16], index: 6, kind: input, shape index: {}]
  %s7 = inlined_call_operand.vmem [shape: f32[1,16], index: 7, kind: input, shape index: {}]
  %s8 = inlined_call_operand.vmem [shape: f32[16,3], index: 8, kind: input, shape index: {}]
  %s9 = inlined_call_operand.vmem [shape: f32[1,3], index: 9, kind: input, shape index: {}]
  %s10 = inlined_call_operand.vmem [shape: f32[8,3], index: 10, kind: input, shape index: {}]
  %s11 = inlined_call_operand.vmem [shape: f32[8,3], index: 11, kind: output, shape index: {0}]
  %s12 = inlined_call_operand.hbm [shape: f32[1,1], index: 12, kind: output, shape index: {1}]
  %13 = xla_tuple %s11, %s12
  %s14 = sld [smem:[#allocation0]]
  $region70: #{gtn_forward.1} parent=0
    _
  %s16 = ssub.s32 1, %s14
  %s17 = scalar_select 0, %s16, %s14
  $region1: #{gtn_forward.1} parent=0
    #allocation2 [shape = 'u8[4096]{0}', space=smem, size = 0x1000, scoped, tag = 'input window, operand 0, single buffered']
    #allocation3 [shape = 's32[1]{0}', space=sflag, size = 0x4, scoped, tag = 'scoped memory for gtn_forward.1']
    #allocation4 [shape = 's32[1]{0}', space=sflag, size = 0x4, scoped, tag = 'scoped memory for gtn_forward.1']
    #allocation5 [shape = 's32[1]{0}', space=sflag, size = 0x4, scoped, tag = 'scoped memory for gtn_forward.1']
    #allocation6 [shape = 'u8[262144]{0}', space=vmem, size = 0x40000, scoped, tag = 'input window, operand 1, single buffered']
    #allocation7 [shape = 'u8[512]{0}', space=vmem, size = 0x400, scoped, tag = 'output window, operand 1, single buffered']
    %18 = vsyncpa [#allocation5], 0
    %19 = vsyncpa [#allocation3], 0
    %20 = vsyncpa [#allocation4], 0
    // Predicated region
    $region2: #{gtn_forward.1} parent=1 // pred_check
      _
    $region3: #{gtn_forward.1} parent=1 // pred_check_branch
      %22 = sbr.rel (0) target = $region5
    $region4: #{gtn_forward.1} parent=1 // pred_region
      %24 = vsyncadd [#allocation5], 0
      %s26 = sshll.u32 %s0, 4
      %s27 = int_to_ptr.vmem [resolvable:$true] %s26
      %29 = dma.vmem_to_smem %s27, 128, [#allocation2], [#allocation5]
    $region5: #{gtn_forward.1} parent=1 // pred_fallthru
      _
    // Predicated region
    $region6: #{gtn_forward.1} parent=1 // pred_check
      _
    $region7: #{gtn_forward.1} parent=1 // pred_check_branch
      %31 = sbr.rel (0) target = $region9
    $region8: #{gtn_forward.1} parent=1 // pred_region
      %33 = vsyncadd [#allocation3], 0
      %s34 = sshll.u32 %s1, 4
      %s35 = int_to_ptr.hbm [resolvable:$true] %s34
      %s36 = sshll.u32 [#allocation6], 4
      %s37 = int_to_ptr.vmem [resolvable:$true] %s36
      %42 = dma.hbm_to_vmem [thread:$0]  %s35, 8192, %s37, [#allocation3], 128, 128, 8
    $region9: #{gtn_forward.1} parent=1 // pred_fallthru
      _
    // Predicated region
    $region10: #{gtn_forward.1} parent=1 // pred_check
      _
    $region11: #{gtn_forward.1} parent=1 // pred_check_branch
      %44 = sbr.rel (0) target = $region13
    $region12: #{gtn_forward.1} parent=1 // pred_region
      _
    $region13: #{gtn_forward.1} parent=1 // pred_fallthru
      _
    // Predicated region
    $region14: #{gtn_forward.1} parent=1 // pred_check
      _
    $region15: #{gtn_forward.1} parent=1 // pred_check_branch
      %46 = sbr.rel (0) target = $region17
    $region16: #{gtn_forward.1} parent=1 // pred_region
      _
    $region17: #{gtn_forward.1} parent=1 // pred_fallthru
      _
    // Predicated region
    $region18: #{gtn_forward.1} parent=1 // pred_check
      _
    $region19: #{gtn_forward.1} parent=1 // pred_check_branch
      %48 = sbr.rel (0) target = $region21
    $region20: #{gtn_forward.1} parent=1 // pred_region
      _
    $region21: #{gtn_forward.1} parent=1 // pred_fallthru
      _
    // Predicated region
    $region22: #{gtn_forward.1} parent=1 // pred_check
      _
    $region23: #{gtn_forward.1} parent=1 // pred_check_branch
      %50 = sbr.rel (0) target = $region25
    $region24: #{gtn_forward.1} parent=1 // pred_region
      _
    $region25: #{gtn_forward.1} parent=1 // pred_fallthru
      _
    // Predicated region
    $region26: #{gtn_forward.1} parent=1 // pred_check
      _
    $region27: #{gtn_forward.1} parent=1 // pred_check_branch
      %52 = sbr.rel (0) target = $region29
    $region28: #{gtn_forward.1} parent=1 // pred_region
      _
    $region29: #{gtn_forward.1} parent=1 // pred_fallthru
      _
    // Predicated region
    $region30: #{gtn_forward.1} parent=1 // pred_check
      _
    $region31: #{gtn_forward.1} parent=1 // pred_check_branch
      %54 = sbr.rel (0) target = $region33
    $region32: #{gtn_forward.1} parent=1 // pred_region
      _
    $region33: #{gtn_forward.1} parent=1 // pred_fallthru
      _
    // Predicated region
    $region34: #{gtn_forward.1} parent=1 // pred_check
      _
    $region35: #{gtn_forward.1} parent=1 // pred_check_branch
      %56 = sbr.rel (0) target = $region37
    $region36: #{gtn_forward.1} parent=1 // pred_region
      _
    $region37: #{gtn_forward.1} parent=1 // pred_fallthru
      _
    // Predicated region
    $region38: #{gtn_forward.1} parent=1 // pred_check
      _
    $region39: #{gtn_forward.1} parent=1 // pred_check_branch
      %58 = sbr.rel (0) target = $region41
    $region40: #{gtn_forward.1} parent=1 // pred_region
      _
    $region41: #{gtn_forward.1} parent=1 // pred_fallthru
      _
    // Predicated region
    $region42: #{gtn_forward.1} parent=1 // pred_check
      _
    $region43: #{gtn_forward.1} parent=1 // pred_check_branch
      %60 = sbr.rel (0) target = $region45
    $region44: #{gtn_forward.1} parent=1 // pred_region
      _
    $region45: #{gtn_forward.1} parent=1 // pred_fallthru
      _
    // Predicated region
    $region46: #{gtn_forward.1} parent=1 // pred_check
      _
    $region47: #{gtn_forward.1} parent=1 // pred_check_branch
      %62 = sbr.rel (0) target = $region49
    $region48: #{gtn_forward.1} parent=1 // pred_region
      %64 = dma.done [#allocation5], 128
    $region49: #{gtn_forward.1} parent=1 // pred_fallthru
      _
    // Predicated region
    $region50: #{gtn_forward.1} parent=1 // pred_check
      _
    $region51: #{gtn_forward.1} parent=1 // pred_check_branch
      %66 = sbr.rel (0) target = $region53
    $region52: #{gtn_forward.1} parent=1 // pred_region
      %68 = dma.done [#allocation3], 8192
    $region53: #{gtn_forward.1} parent=1 // pred_fallthru
      _
    %69 = sfence
    %v70 = vlaneseq
    %v71 = vshrl.u32 %v70, 7
    %v72 = vadd.s32 %v71, 8
    %v73 = vadd.s32 %v71, 16
    %v74 = vadd.s32 %v71, 24
    %v75 = vadd.s32 %v71, 32
    %v76 = vadd.s32 %v71, 40
    %v77 = vadd.s32 %v71, 48
    %v78 = vadd.s32 %v71, 56
    %v79 = vadd.s32 %v71, 64
    %v80 = vadd.s32 %v71, 72
    %v81 = vadd.s32 %v71, 80
    %v82 = vadd.s32 %v71, 88
    %v83 = vadd.s32 %v71, 96
    %v84 = vadd.s32 %v71, 104
    %v85 = vadd.s32 %v71, 112
    %v86 = vadd.s32 %v71, 120
    %v87 = vlaneseq
    %v88 = vand.u32 %v87, 127
    %vm89 = vcmp.eq.s32.totalorder %v71, %v88
    %vm90 = vcmp.eq.s32.totalorder %v72, %v88
    %vm91 = vcmp.eq.s32.totalorder %v73, %v88
    %vm92 = vcmp.eq.s32.totalorder %v74, %v88
    %vm93 = vcmp.eq.s32.totalorder %v75, %v88
    %vm94 = vcmp.eq.s32.totalorder %v76, %v88
    %vm95 = vcmp.eq.s32.totalorder %v77, %v88
    %vm96 = vcmp.eq.s32.totalorder %v78, %v88
    %vm97 = vcmp.eq.s32.totalorder %v79, %v88
    %vm98 = vcmp.eq.s32.totalorder %v80, %v88
    %vm99 = vcmp.eq.s32.totalorder %v81, %v88
    %vm100 = vcmp.eq.s32.totalorder %v82, %v88
    %vm101 = vcmp.eq.s32.totalorder %v83, %v88
    %vm102 = vcmp.eq.s32.totalorder %v84, %v88
    %vm103 = vcmp.eq.s32.totalorder %v85, %v88
    %vm104 = vcmp.eq.s32.totalorder %v86, %v88
    %s105 = sld [smem:[#allocation2]]
    %v106 = vld [vmem:[#allocation6] sm:$0xff]
    %v107 = vld [vmem:[#allocation6 + $0x8] sm:$0xff]
    %v108 = vld [vmem:[#allocation6 + $0x10] sm:$0xff]
    %v109 = vld [vmem:[#allocation6 + $0x18] sm:$0xff]
    %v110 = vld [vmem:[#allocation6 + $0x20] sm:$0xff]
    %v111 = vld [vmem:[#allocation6 + $0x28] sm:$0xff]
    %v112 = vld [vmem:[#allocation6 + $0x30] sm:$0xff]
    %v113 = vld [vmem:[#allocation6 + $0x38] sm:$0xff]
    %v114 = vld [vmem:[#allocation6 + $0x40] sm:$0xff]
    %v115 = vld [vmem:[#allocation6 + $0x48] sm:$0xff]
    %v116 = vld [vmem:[#allocation6 + $0x50] sm:$0xff]
    %v117 = vld [vmem:[#allocation6 + $0x58] sm:$0xff]
    %v118 = vld [vmem:[#allocation6 + $0x60] sm:$0xff]
    %v119 = vld [vmem:[#allocation6 + $0x68] sm:$0xff]
    %v120 = vld [vmem:[#allocation6 + $0x70] sm:$0xff]
    %v121 = vld [vmem:[#allocation6 + $0x78] sm:$0xff]
    %v122 = vstv %s105
    %v123 = vmul.f32 %v122, %v106
    %v124 = vmul.f32 %v122, %v107
    %v125 = vmul.f32 %v122, %v108
    %v126 = vmul.f32 %v122, %v109
    %v127 = vmul.f32 %v122, %v110
    %v128 = vmul.f32 %v122, %v111
    %v129 = vmul.f32 %v122, %v112
    %v130 = vmul.f32 %v122, %v113
    %v131 = vmul.f32 %v122, %v114
    %v132 = vmul.f32 %v122, %v115
    %v133 = vmul.f32 %v122, %v116
    %v134 = vmul.f32 %v122, %v117
    %v135 = vmul.f32 %v122, %v118
    %v136 = vmul.f32 %v122, %v119
    %v137 = vmul.f32 %v122, %v120
    %v138 = vmul.f32 %v122, %v121
    %s139 = sld [smem:[#allocation2 + $0x1]]
    %s140 = scalar_lea.vmem [#allocation6], 128
    %v141 = vld [vmem:[%s140] sm:$0xff]
    %v142 = vld [vmem:[%s140 + $0x8] sm:$0xff]
    %v143 = vld [vmem:[%s140 + $0x10] sm:$0xff]
    %v144 = vld [vmem:[%s140 + $0x18] sm:$0xff]
    %v145 = vld [vmem:[%s140 + $0x20] sm:$0xff]
    %v146 = vld [vmem:[%s140 + $0x28] sm:$0xff]
    %v147 = vld [vmem:[%s140 + $0x30] sm:$0xff]
    %v148 = vld [vmem:[%s140 + $0x38] sm:$0xff]
    %v149 = vld [vmem:[%s140 + $0x40] sm:$0xff]
    %v150 = vld [vmem:[%s140 + $0x48] sm:$0xff]
    %v151 = vld [vmem:[%s140 + $0x50] sm:$0xff]
    %v152 = vld [vmem:[%s140 + $0x58] sm:$0xff]
    %v153 = vld [vmem:[%s140 + $0x60] sm:$0xff]
    %v154 = vld [vmem:[%s140 + $0x68] sm:$0xff]
    %v155 = vld [vmem:[%s140 + $0x70] sm:$0xff]
    %v156 = vld [vmem:[%s140 + $0x78] sm:$0xff]
    %v157 = vstv %s139
    %v158 = vmul.f32 %v157, %v141
    %v159 = vmul.f32 %v157, %v142
    %v160 = vmul.f32 %v157, %v143
    %v161 = vmul.f32 %v157, %v144
    %v162 = vmul.f32 %v157, %v145
    %v163 = vmul.f32 %v157, %v146
    %v164 = vmul.f32 %v157, %v147
    %v165 = vmul.f32 %v157, %v148
    %v166 = vmul.f32 %v157, %v149
    %v167 = vmul.f32 %v157, %v150
    %v168 = vmul.f32 %v157, %v151
    %v169 = vmul.f32 %v157, %v152
    %v170 = vmul.f32 %v157, %v153
    %v171 = vmul.f32 %v157, %v154
    %v172 = vmul.f32 %v157, %v155
    %v173 = vmul.f32 %v157, %v156
    %v174 = vadd.f32 %v123, %v158
    %v175 = vadd.f32 %v124, %v159
    %v176 = vadd.f32 %v125, %v160
    %v177 = vadd.f32 %v126, %v161
    %v178 = vadd.f32 %v127, %v162
    %v179 = vadd.f32 %v128, %v163
    %v180 = vadd.f32 %v129, %v164
    %v181 = vadd.f32 %v130, %v165
    %v182 = vadd.f32 %v131, %v166
    %v183 = vadd.f32 %v132, %v167
    %v184 = vadd.f32 %v133, %v168
    %v185 = vadd.f32 %v134, %v169
    %v186 = vadd.f32 %v135, %v170
    %v187 = vadd.f32 %v136, %v171
    %v188 = vadd.f32 %v137, %v172
    %v189 = vadd.f32 %v138, %v173
    %s190 = sld [smem:[#allocation2 + $0x2]]
    %s191 = scalar_lea.vmem [#allocation6], 256
    %v192 = vld [vmem:[%s191] sm:$0xff]
    %v193 = vld [vmem:[%s191 + $0x8] sm:$0xff]
    %v194 = vld [vmem:[%s191 + $0x10] sm:$0xff]
    %v195 = vld [vmem:[%s191 + $0x18] sm:$0xff]
    %v196 = vld [vmem:[%s191 + $0x20] sm:$0xff]
    %v197 = vld [vmem:[%s191 + $0x28] sm:$0xff]
    %v198 = vld [vmem:[%s191 + $0x30] sm:$0xff]
    %v199 = vld [vmem:[%s191 + $0x38] sm:$0xff]
    %v200 = vld [vmem:[%s191 + $0x40] sm:$0xff]
    %v201 = vld [vmem:[%s191 + $0x48] sm:$0xff]
    %v202 = vld [vmem:[%s191 + $0x50] sm:$0xff]
    %v203 = vld [vmem:[%s191 + $0x58] sm:$0xff]
    %v204 = vld [vmem:[%s191 + $0x60] sm:$0xff]
    %v205 = vld [vmem:[%s191 + $0x68] sm:$0xff]
    %v206 = vld [vmem:[%s191 + $0x70] sm:$0xff]
    %v207 = vld [vmem:[%s191 + $0x78] sm:$0xff]
    %v208 = vstv %s190
    %v209 = vmul.f32 %v208, %v192
    %v210 = vmul.f32 %v208, %v193
    %v211 = vmul.f32 %v208, %v194
    %v212 = vmul.f32 %v208, %v195
    %v213 = vmul.f32 %v208, %v196
    %v214 = vmul.f32 %v208, %v197
    %v215 = vmul.f32 %v208, %v198
    %v216 = vmul.f32 %v208, %v199
    %v217 = vmul.f32 %v208, %v200
    %v218 = vmul.f32 %v208, %v201
    %v219 = vmul.f32 %v208, %v202
    %v220 = vmul.f32 %v208, %v203
    %v221 = vmul.f32 %v208, %v204
    %v222 = vmul.f32 %v208, %v205
    %v223 = vmul.f32 %v208, %v206
    %v224 = vmul.f32 %v208, %v207
    %v225 = vadd.f32 %v174, %v209
    %v226 = vadd.f32 %v175, %v210
    %v227 = vadd.f32 %v176, %v211
    %v228 = vadd.f32 %v177, %v212
    %v229 = vadd.f32 %v178, %v213
    %v230 = vadd.f32 %v179, %v214
    %v231 = vadd.f32 %v180, %v215
    %v232 = vadd.f32 %v181, %v216
    %v233 = vadd.f32 %v182, %v217
    %v234 = vadd.f32 %v183, %v218
    %v235 = vadd.f32 %v184, %v219
    %v236 = vadd.f32 %v185, %v220
    %v237 = vadd.f32 %v186, %v221
    %v238 = vadd.f32 %v187, %v222
    %v239 = vadd.f32 %v188, %v223
    %v240 = vadd.f32 %v189, %v224
    %s241 = sld [smem:[#allocation2 + $0x3]]
    %s242 = scalar_lea.vmem [#allocation6], 384
    %v243 = vld [vmem:[%s242] sm:$0xff]
    %v244 = vld [vmem:[%s242 + $0x8] sm:$0xff]
    %v245 = vld [vmem:[%s242 + $0x10] sm:$0xff]
    %v246 = vld [vmem:[%s242 + $0x18] sm:$0xff]
    %v247 = vld [vmem:[%s242 + $0x20] sm:$0xff]
    %v248 = vld [vmem:[%s242 + $0x28] sm:$0xff]
    %v249 = vld [vmem:[%s242 + $0x30] sm:$0xff]
    %v250 = vld [vmem:[%s242 + $0x38] sm:$0xff]
    %v251 = vld [vmem:[%s242 + $0x40] sm:$0xff]
    %v252 = vld [vmem:[%s242 + $0x48] sm:$0xff]
    %v253 = vld [vmem:[%s242 + $0x50] sm:$0xff]
    %v254 = vld [vmem:[%s242 + $0x58] sm:$0xff]
    %v255 = vld [vmem:[%s242 + $0x60] sm:$0xff]
    %v256 = vld [vmem:[%s242 + $0x68] sm:$0xff]
    %v257 = vld [vmem:[%s242 + $0x70] sm:$0xff]
    %v258 = vld [vmem:[%s242 + $0x78] sm:$0xff]
    %v259 = vstv %s241
    %v260 = vmul.f32 %v259, %v243
    %v261 = vmul.f32 %v259, %v244
    %v262 = vmul.f32 %v259, %v245
    %v263 = vmul.f32 %v259, %v246
    %v264 = vmul.f32 %v259, %v247
    %v265 = vmul.f32 %v259, %v248
    %v266 = vmul.f32 %v259, %v249
    %v267 = vmul.f32 %v259, %v250
    %v268 = vmul.f32 %v259, %v251
    %v269 = vmul.f32 %v259, %v252
    %v270 = vmul.f32 %v259, %v253
    %v271 = vmul.f32 %v259, %v254
    %v272 = vmul.f32 %v259, %v255
    %v273 = vmul.f32 %v259, %v256
    %v274 = vmul.f32 %v259, %v257
    %v275 = vmul.f32 %v259, %v258
    %v276 = vadd.f32 %v225, %v260
    %v277 = vadd.f32 %v226, %v261
    %v278 = vadd.f32 %v227, %v262
    %v279 = vadd.f32 %v228, %v263
    %v280 = vadd.f32 %v229, %v264
    %v281 = vadd.f32 %v230, %v265
    %v282 = vadd.f32 %v231, %v266
    %v283 = vadd.f32 %v232, %v267
    %v284 = vadd.f32 %v233, %v268
    %v285 = vadd.f32 %v234, %v269
    %v286 = vadd.f32 %v235, %v270
    %v287 = vadd.f32 %v236, %v271
    %v288 = vadd.f32 %v237, %v272
    %v289 = vadd.f32 %v238, %v273
    %v290 = vadd.f32 %v239, %v274
    %v291 = vadd.f32 %v240, %v275
    %v292 = vpack.c.bf16 %v277, %v276
    %v293 = vpack.c.bf16 %v279, %v278
    %v294 = vpack.c.bf16 %v281, %v280
    %v295 = vpack.c.bf16 %v283, %v282
    %v296 = vpack.c.bf16 %v285, %v284
    %v297 = vpack.c.bf16 %v287, %v286
    %v298 = vpack.c.bf16 %v289, %v288
    %v299 = vpack.c.bf16 %v291, %v290
    %s300 = sld [smem:[#allocation2 + $0x100]]
    %v301 = vstv %s300
    %v302 = vmul.f32 %v301, %v106
    %v303 = vmul.f32 %v301, %v107
    %v304 = vmul.f32 %v301, %v108
    %v305 = vmul.f32 %v301, %v109
    %v306 = vmul.f32 %v301, %v110
    %v307 = vmul.f32 %v301, %v111
    %v308 = vmul.f32 %v301, %v112
    %v309 = vmul.f32 %v301, %v113
    %v310 = vmul.f32 %v301, %v114
    %v311 = vmul.f32 %v301, %v115
    %v312 = vmul.f32 %v301, %v116
    %v313 = vmul.f32 %v301, %v117
    %v314 = vmul.f32 %v301, %v118
    %v315 = vmul.f32 %v301, %v119
    %v316 = vmul.f32 %v301, %v120
    %v317 = vmul.f32 %v301, %v121
    %s318 = sld [smem:[#allocation2 + $0x101]]
    %v319 = vstv %s318
    %v320 = vmul.f32 %v319, %v141
    %v321 = vmul.f32 %v319, %v142
    %v322 = vmul.f32 %v319, %v143
    %v323 = vmul.f32 %v319, %v144
    %v324 = vmul.f32 %v319, %v145
    %v325 = vmul.f32 %v319, %v146
    %v326 = vmul.f32 %v319, %v147
    %v327 = vmul.f32 %v319, %v148
    %v328 = vmul.f32 %v319, %v149
    %v329 = vmul.f32 %v319, %v150
    %v330 = vmul.f32 %v319, %v151
    %v331 = vmul.f32 %v319, %v152
    %v332 = vmul.f32 %v319, %v153
    %v333 = vmul.f32 %v319, %v154
    %v334 = vmul.f32 %v319, %v155
    %v335 = vmul.f32 %v319, %v156
    %v336 = vadd.f32 %v302, %v320
    %v337 = vadd.f32 %v303, %v321
    %v338 = vadd.f32 %v304, %v322
    %v339 = vadd.f32 %v305, %v323
    %v340 = vadd.f32 %v306, %v324
    %v341 = vadd.f32 %v307, %v325
    %v342 = vadd.f32 %v308, %v326
    %v343 = vadd.f32 %v309, %v327
    %v344 = vadd.f32 %v310, %v328
    %v345 = vadd.f32 %v311, %v329
    %v346 = vadd.f32 %v312, %v330
    %v347 = vadd.f32 %v313, %v331
    %v348 = vadd.f32 %v314, %v332
    %v349 = vadd.f32 %v315, %v333
    %v350 = vadd.f32 %v316, %v334
    %v351 = vadd.f32 %v317, %v335
    %s352 = sld [smem:[#allocation2 + $0x102]]
    %v353 = vstv %s352
    %v354 = vmul.f32 %v353, %v192
    %v355 = vmul.f32 %v353, %v193
    %v356 = vmul.f32 %v353, %v194
    %v357 = vmul.f32 %v353, %v195
    %v358 = vmul.f32 %v353, %v196
    %v359 = vmul.f32 %v353, %v197
    %v360 = vmul.f32 %v353, %v198
    %v361 = vmul.f32 %v353, %v199
    %v362 = vmul.f32 %v353, %v200
    %v363 = vmul.f32 %v353, %v201
    %v364 = vmul.f32 %v353, %v202
    %v365 = vmul.f32 %v353, %v203
    %v366 = vmul.f32 %v353, %v204
    %v367 = vmul.f32 %v353, %v205
    %v368 = vmul.f32 %v353, %v206
    %v369 = vmul.f32 %v353, %v207
    %v370 = vadd.f32 %v336, %v354
    %v371 = vadd.f32 %v337, %v355
    %v372 = vadd.f32 %v338, %v356
    %v373 = vadd.f32 %v339, %v357
    %v374 = vadd.f32 %v340, %v358
    %v375 = vadd.f32 %v341, %v359
    %v376 = vadd.f32 %v342, %v360
    %v377 = vadd.f32 %v343, %v361
    %v378 = vadd.f32 %v344, %v362
    %v379 = vadd.f32 %v345, %v363
    %v380 = vadd.f32 %v346, %v364
    %v381 = vadd.f32 %v347, %v365
    %v382 = vadd.f32 %v348, %v366
    %v383 = vadd.f32 %v349, %v367
    %v384 = vadd.f32 %v350, %v368
    %v385 = vadd.f32 %v351, %v369
    %s386 = sld [smem:[#allocation2 + $0x103]]
    %v387 = vstv %s386
    %v388 = vmul.f32 %v387, %v243
    %v389 = vmul.f32 %v387, %v244
    %v390 = vmul.f32 %v387, %v245
    %v391 = vmul.f32 %v387, %v246
    %v392 = vmul.f32 %v387, %v247
    %v393 = vmul.f32 %v387, %v248
    %v394 = vmul.f32 %v387, %v249
    %v395 = vmul.f32 %v387, %v250
    %v396 = vmul.f32 %v387, %v251
    %v397 = vmul.f32 %v387, %v252
    %v398 = vmul.f32 %v387, %v253
    %v399 = vmul.f32 %v387, %v254
    %v400 = vmul.f32 %v387, %v255
    %v401 = vmul.f32 %v387, %v256
    %v402 = vmul.f32 %v387, %v257
    %v403 = vmul.f32 %v387, %v258
    %v404 = vadd.f32 %v370, %v388
    %v405 = vadd.f32 %v371, %v389
    %v406 = vadd.f32 %v372, %v390
    %v407 = vadd.f32 %v373, %v391
    %v408 = vadd.f32 %v374, %v392
    %v409 = vadd.f32 %v375, %v393
    %v410 = vadd.f32 %v376, %v394
    %v411 = vadd.f32 %v377, %v395
    %v412 = vadd.f32 %v378, %v396
    %v413 = vadd.f32 %v379, %v397
    %v414 = vadd.f32 %v380, %v398
    %v415 = vadd.f32 %v381, %v399
    %v416 = vadd.f32 %v382, %v400
    %v417 = vadd.f32 %v383, %v401
    %v418 = vadd.f32 %v384, %v402
    %v419 = vadd.f32 %v385, %v403
    %v420 = vpack.c.bf16 %v405, %v404
    %v421 = vpack.c.bf16 %v407, %v406
    %v422 = vpack.c.bf16 %v409, %v408
    %v423 = vpack.c.bf16 %v411, %v410
    %v424 = vpack.c.bf16 %v413, %v412
    %v425 = vpack.c.bf16 %v415, %v414
    %v426 = vpack.c.bf16 %v417, %v416
    %v427 = vpack.c.bf16 %v419, %v418
    %428 = vmatpush.bf16.msra.mxu0 %v299
    %429 = vmatpush.bf16.msra.mxu0 %v298
    %430 = vmatpush.bf16.msra.mxu0 %v297
    %431 = vmatpush.bf16.msra.mxu0 %v296
    %432 = vmatpush.bf16.msra.mxu0 %v295
    %433 = vmatpush.bf16.msra.mxu0 %v294
    %434 = vmatpush.bf16.msra.mxu0 %v293
    %435 = vmatpush.bf16.msra.mxu0 %v292
    %436 = vmatmul.bf16.gmra.mxu0 %v420
    %v437 = vpop.f32.mrf.mxu0
    %v438 = vadd.f32 0.0, %v437
    %v439 = vpop.f32.mrf.mxu0
    %v440 = vadd.f32 0.0, %v439
    %441 = vmatmul.bf16.gmra.mxu0 %v421
    %v442 = vpop.f32.mrf.mxu0
    %v443 = vadd.f32 0.0, %v442
    %v444 = vpop.f32.mrf.mxu0
    %v445 = vadd.f32 0.0, %v444
    %446 = vmatmul.bf16.gmra.mxu0 %v422
    %v447 = vpop.f32.mrf.mxu0
    %v448 = vadd.f32 0.0, %v447
    %v449 = vpop.f32.mrf.mxu0
    %v450 = vadd.f32 0.0, %v449
    %451 = vmatmul.bf16.gmra.mxu0 %v423
    %v452 = vpop.f32.mrf.mxu0
    %v453 = vadd.f32 0.0, %v452
    %v454 = vpop.f32.mrf.mxu0
    %v455 = vadd.f32 0.0, %v454
    %456 = vmatmul.bf16.gmra.mxu0 %v424
    %v457 = vpop.f32.mrf.mxu0
    %v458 = vadd.f32 0.0, %v457
    %v459 = vpop.f32.mrf.mxu0
    %v460 = vadd.f32 0.0, %v459
    %461 = vmatmul.bf16.gmra.mxu0 %v425
    %v462 = vpop.f32.mrf.mxu0
    %v463 = vadd.f32 0.0, %v462
    %v464 = vpop.f32.mrf.mxu0
    %v465 = vadd.f32 0.0, %v464
    %466 = vmatmul.bf16.gmra.mxu0 %v426
    %v467 = vpop.f32.mrf.mxu0
    %v468 = vadd.f32 0.0, %v467
    %v469 = vpop.f32.mrf.mxu0
    %v470 = vadd.f32 0.0, %v469
    %471 = vmatmul.bf16.gmra.mxu0 %v427
    %v472 = vpop.f32.mrf.mxu0
    %v473 = vadd.f32 0.0, %v472
    %v474 = vpop.f32.mrf.mxu0
    %v475 = vadd.f32 0.0, %v474
    %476 = vdwg.mxu0
    %s477 = sld [smem:[#allocation2 + $0x80]]
    %v478 = vstv %s477
    %v479 = vmul.f32 %v478, %v106
    %v480 = vmul.f32 %v478, %v107
    %v481 = vmul.f32 %v478, %v108
    %v482 = vmul.f32 %v478, %v109
    %v483 = vmul.f32 %v478, %v110
    %v484 = vmul.f32 %v478, %v111
    %v485 = vmul.f32 %v478, %v112
    %v486 = vmul.f32 %v478, %v113
    %v487 = vmul.f32 %v478, %v114
    %v488 = vmul.f32 %v478, %v115
    %v489 = vmul.f32 %v478, %v116
    %v490 = vmul.f32 %v478, %v117
    %v491 = vmul.f32 %v478, %v118
    %v492 = vmul.f32 %v478, %v119
    %v493 = vmul.f32 %v478, %v120
    %v494 = vmul.f32 %v478, %v121
    %s495 = sld [smem:[#allocation2 + $0x81]]
    %v496 = vstv %s495
    %v497 = vmul.f32 %v496, %v141
    %v498 = vmul.f32 %v496, %v142
    %v499 = vmul.f32 %v496, %v143
    %v500 = vmul.f32 %v496, %v144
    %v501 = vmul.f32 %v496, %v145
    %v502 = vmul.f32 %v496, %v146
    %v503 = vmul.f32 %v496, %v147
    %v504 = vmul.f32 %v496, %v148
    %v505 = vmul.f32 %v496, %v149
    %v506 = vmul.f32 %v496, %v150
    %v507 = vmul.f32 %v496, %v151
    %v508 = vmul.f32 %v496, %v152
    %v509 = vmul.f32 %v496, %v153
    %v510 = vmul.f32 %v496, %v154
    %v511 = vmul.f32 %v496, %v155
    %v512 = vmul.f32 %v496, %v156
    %v513 = vadd.f32 %v479, %v497
    %v514 = vadd.f32 %v480, %v498
    %v515 = vadd.f32 %v481, %v499
    %v516 = vadd.f32 %v482, %v500
    %v517 = vadd.f32 %v483, %v501
    %v518 = vadd.f32 %v484, %v502
    %v519 = vadd.f32 %v485, %v503
    %v520 = vadd.f32 %v486, %v504
    %v521 = vadd.f32 %v487, %v505
    %v522 = vadd.f32 %v488, %v506
    %v523 = vadd.f32 %v489, %v507
    %v524 = vadd.f32 %v490, %v508
    %v525 = vadd.f32 %v491, %v509
    %v526 = vadd.f32 %v492, %v510
    %v527 = vadd.f32 %v493, %v511
    %v528 = vadd.f32 %v494, %v512
    %s529 = sld [smem:[#allocation2 + $0x82]]
    %v530 = vstv %s529
    %v531 = vmul.f32 %v530, %v192
    %v532 = vmul.f32 %v530, %v193
    %v533 = vmul.f32 %v530, %v194
    %v534 = vmul.f32 %v530, %v195
    %v535 = vmul.f32 %v530, %v196
    %v536 = vmul.f32 %v530, %v197
    %v537 = vmul.f32 %v530, %v198
    %v538 = vmul.f32 %v530, %v199
    %v539 = vmul.f32 %v530, %v200
    %v540 = vmul.f32 %v530, %v201
    %v541 = vmul.f32 %v530, %v202
    %v542 = vmul.f32 %v530, %v203
    %v543 = vmul.f32 %v530, %v204
    %v544 = vmul.f32 %v530, %v205
    %v545 = vmul.f32 %v530, %v206
    %v546 = vmul.f32 %v530, %v207
    %v547 = vadd.f32 %v513, %v531
    %v548 = vadd.f32 %v514, %v532
    %v549 = vadd.f32 %v515, %v533
    %v550 = vadd.f32 %v516, %v534
    %v551 = vadd.f32 %v517, %v535
    %v552 = vadd.f32 %v518, %v536
    %v553 = vadd.f32 %v519, %v537
    %v554 = vadd.f32 %v520, %v538
    %v555 = vadd.f32 %v521, %v539
    %v556 = vadd.f32 %v522, %v540
    %v557 = vadd.f32 %v523, %v541
    %v558 = vadd.f32 %v524, %v542
    %v559 = vadd.f32 %v525, %v543
    %v560 = vadd.f32 %v526, %v544
    %v561 = vadd.f32 %v527, %v545
    %v562 = vadd.f32 %v528, %v546
    %s563 = sld [smem:[#allocation2 + $0x83]]
    %v564 = vstv %s563
    %v565 = vmul.f32 %v564, %v243
    %v566 = vmul.f32 %v564, %v244
    %v567 = vmul.f32 %v564, %v245
    %v568 = vmul.f32 %v564, %v246
    %v569 = vmul.f32 %v564, %v247
    %v570 = vmul.f32 %v564, %v248
    %v571 = vmul.f32 %v564, %v249
    %v572 = vmul.f32 %v564, %v250
    %v573 = vmul.f32 %v564, %v251
    %v574 = vmul.f32 %v564, %v252
    %v575 = vmul.f32 %v564, %v253
    %v576 = vmul.f32 %v564, %v254
    %v577 = vmul.f32 %v564, %v255
    %v578 = vmul.f32 %v564, %v256
    %v579 = vmul.f32 %v564, %v257
    %v580 = vmul.f32 %v564, %v258
    %v581 = vadd.f32 %v547, %v565
    %v582 = vadd.f32 %v548, %v566
    %v583 = vadd.f32 %v549, %v567
    %v584 = vadd.f32 %v550, %v568
    %v585 = vadd.f32 %v551, %v569
    %v586 = vadd.f32 %v552, %v570
    %v587 = vadd.f32 %v553, %v571
    %v588 = vadd.f32 %v554, %v572
    %v589 = vadd.f32 %v555, %v573
    %v590 = vadd.f32 %v556, %v574
    %v591 = vadd.f32 %v557, %v575
    %v592 = vadd.f32 %v558, %v576
    %v593 = vadd.f32 %v559, %v577
    %v594 = vadd.f32 %v560, %v578
    %v595 = vadd.f32 %v561, %v579
    %v596 = vadd.f32 %v562, %v580
    %v597 = vpack.c.bf16 %v582, %v581
    %v598 = vpack.c.bf16 %v584, %v583
    %v599 = vpack.c.bf16 %v586, %v585
    %v600 = vpack.c.bf16 %v588, %v587
    %v601 = vpack.c.bf16 %v590, %v589
    %v602 = vpack.c.bf16 %v592, %v591
    %v603 = vpack.c.bf16 %v594, %v593
    %v604 = vpack.c.bf16 %v596, %v595
    %s605 = sld [smem:[#allocation2 + $0x180]]
    %v606 = vstv %s605
    %v607 = vmul.f32 %v606, %v106
    %v608 = vmul.f32 %v606, %v107
    %v609 = vmul.f32 %v606, %v108
    %v610 = vmul.f32 %v606, %v109
    %v611 = vmul.f32 %v606, %v110
    %v612 = vmul.f32 %v606, %v111
    %v613 = vmul.f32 %v606, %v112
    %v614 = vmul.f32 %v606, %v113
    %v615 = vmul.f32 %v606, %v114
    %v616 = vmul.f32 %v606, %v115
    %v617 = vmul.f32 %v606, %v116
    %v618 = vmul.f32 %v606, %v117
    %v619 = vmul.f32 %v606, %v118
    %v620 = vmul.f32 %v606, %v119
    %v621 = vmul.f32 %v606, %v120
    %v622 = vmul.f32 %v606, %v121
    %s623 = sld [smem:[#allocation2 + $0x181]]
    %v624 = vstv %s623
    %v625 = vmul.f32 %v624, %v141
    %v626 = vmul.f32 %v624, %v142
    %v627 = vmul.f32 %v624, %v143
    %v628 = vmul.f32 %v624, %v144
    %v629 = vmul.f32 %v624, %v145
    %v630 = vmul.f32 %v624, %v146
    %v631 = vmul.f32 %v624, %v147
    %v632 = vmul.f32 %v624, %v148
    %v633 = vmul.f32 %v624, %v149
    %v634 = vmul.f32 %v624, %v150
    %v635 = vmul.f32 %v624, %v151
    %v636 = vmul.f32 %v624, %v152
    %v637 = vmul.f32 %v624, %v153
    %v638 = vmul.f32 %v624, %v154
    %v639 = vmul.f32 %v624, %v155
    %v640 = vmul.f32 %v624, %v156
    %v641 = vadd.f32 %v607, %v625
    %v642 = vadd.f32 %v608, %v626
    %v643 = vadd.f32 %v609, %v627
    %v644 = vadd.f32 %v610, %v628
    %v645 = vadd.f32 %v611, %v629
    %v646 = vadd.f32 %v612, %v630
    %v647 = vadd.f32 %v613, %v631
    %v648 = vadd.f32 %v614, %v632
    %v649 = vadd.f32 %v615, %v633
    %v650 = vadd.f32 %v616, %v634
    %v651 = vadd.f32 %v617, %v635
    %v652 = vadd.f32 %v618, %v636
    %v653 = vadd.f32 %v619, %v637
    %v654 = vadd.f32 %v620, %v638
    %v655 = vadd.f32 %v621, %v639
    %v656 = vadd.f32 %v622, %v640
    %s657 = sld [smem:[#allocation2 + $0x182]]
    %v658 = vstv %s657
    %v659 = vmul.f32 %v658, %v192
    %v660 = vmul.f32 %v658, %v193
    %v661 = vmul.f32 %v658, %v194
    %v662 = vmul.f32 %v658, %v195
    %v663 = vmul.f32 %v658, %v196
    %v664 = vmul.f32 %v658, %v197
    %v665 = vmul.f32 %v658, %v198
    %v666 = vmul.f32 %v658, %v199
    %v667 = vmul.f32 %v658, %v200
    %v668 = vmul.f32 %v658, %v201
    %v669 = vmul.f32 %v658, %v202
    %v670 = vmul.f32 %v658, %v203
    %v671 = vmul.f32 %v658, %v204
    %v672 = vmul.f32 %v658, %v205
    %v673 = vmul.f32 %v658, %v206
    %v674 = vmul.f32 %v658, %v207
    %v675 = vadd.f32 %v641, %v659
    %v676 = vadd.f32 %v642, %v660
    %v677 = vadd.f32 %v643, %v661
    %v678 = vadd.f32 %v644, %v662
    %v679 = vadd.f32 %v645, %v663
    %v680 = vadd.f32 %v646, %v664
    %v681 = vadd.f32 %v647, %v665
    %v682 = vadd.f32 %v648, %v666
    %v683 = vadd.f32 %v649, %v667
    %v684 = vadd.f32 %v650, %v668
    %v685 = vadd.f32 %v651, %v669
    %v686 = vadd.f32 %v652, %v670
    %v687 = vadd.f32 %v653, %v671
    %v688 = vadd.f32 %v654, %v672
    %v689 = vadd.f32 %v655, %v673
    %v690 = vadd.f32 %v656, %v674
    %s691 = sld [smem:[#allocation2 + $0x183]]
    %v692 = vstv %s691
    %v693 = vmul.f32 %v692, %v243
    %v694 = vmul.f32 %v692, %v244
    %v695 = vmul.f32 %v692, %v245
    %v696 = vmul.f32 %v692, %v246
    %v697 = vmul.f32 %v692, %v247
    %v698 = vmul.f32 %v692, %v248
    %v699 = vmul.f32 %v692, %v249
    %v700 = vmul.f32 %v692, %v250
    %v701 = vmul.f32 %v692, %v251
    %v702 = vmul.f32 %v692, %v252
    %v703 = vmul.f32 %v692, %v253
    %v704 = vmul.f32 %v692, %v254
    %v705 = vmul.f32 %v692, %v255
    %v706 = vmul.f32 %v692, %v256
    %v707 = vmul.f32 %v692, %v257
    %v708 = vmul.f32 %v692, %v258
    %v709 = vadd.f32 %v675, %v693
    %v710 = vadd.f32 %v676, %v694
    %v711 = vadd.f32 %v677, %v695
    %v712 = vadd.f32 %v678, %v696
    %v713 = vadd.f32 %v679, %v697
    %v714 = vadd.f32 %v680, %v698
    %v715 = vadd.f32 %v681, %v699
    %v716 = vadd.f32 %v682, %v700
    %v717 = vadd.f32 %v683, %v701
    %v718 = vadd.f32 %v684, %v702
    %v719 = vadd.f32 %v685, %v703
    %v720 = vadd.f32 %v686, %v704
    %v721 = vadd.f32 %v687, %v705
    %v722 = vadd.f32 %v688, %v706
    %v723 = vadd.f32 %v689, %v707
    %v724 = vadd.f32 %v690, %v708
    %v725 = vpack.c.bf16 %v710, %v709
    %v726 = vpack.c.bf16 %v712, %v711
    %v727 = vpack.c.bf16 %v714, %v713
    %v728 = vpack.c.bf16 %v716, %v715
    %v729 = vpack.c.bf16 %v718, %v717
    %v730 = vpack.c.bf16 %v720, %v719
    %v731 = vpack.c.bf16 %v722, %v721
    %v732 = vpack.c.bf16 %v724, %v723
    %733 = vmatpush.bf16.msra.mxu0 %v604
    %734 = vmatpush.bf16.msra.mxu0 %v603
    %735 = vmatpush.bf16.msra.mxu0 %v602
    %736 = vmatpush.bf16.msra.mxu0 %v601
    %737 = vmatpush.bf16.msra.mxu0 %v600
    %738 = vmatpush.bf16.msra.mxu0 %v599
    %739 = vmatpush.bf16.msra.mxu0 %v598
    %740 = vmatpush.bf16.msra.mxu0 %v597
    %741 = vmatmul.bf16.gmra.mxu0 %v725
    %v742 = vpop.f32.mrf.mxu0
    %v743 = vadd.f32 0.0, %v742
    %v744 = vpop.f32.mrf.mxu0
    %v745 = vadd.f32 0.0, %v744
    %746 = vmatmul.bf16.gmra.mxu0 %v726
    %v747 = vpop.f32.mrf.mxu0
    %v748 = vadd.f32 0.0, %v747
    %v749 = vpop.f32.mrf.mxu0
    %v750 = vadd.f32 0.0, %v749
    %751 = vmatmul.bf16.gmra.mxu0 %v727
    %v752 = vpop.f32.mrf.mxu0
    %v753 = vadd.f32 0.0, %v752
    %v754 = vpop.f32.mrf.mxu0
    %v755 = vadd.f32 0.0, %v754
    %756 = vmatmul.bf16.gmra.mxu0 %v728
    %v757 = vpop.f32.mrf.mxu0
    %v758 = vadd.f32 0.0, %v757
    %v759 = vpop.f32.mrf.mxu0
    %v760 = vadd.f32 0.0, %v759
    %761 = vmatmul.bf16.gmra.mxu0 %v729
    %v762 = vpop.f32.mrf.mxu0
    %v763 = vadd.f32 0.0, %v762
    %v764 = vpop.f32.mrf.mxu0
    %v765 = vadd.f32 0.0, %v764
    %766 = vmatmul.bf16.gmra.mxu0 %v730
    %v767 = vpop.f32.mrf.mxu0
    %v768 = vadd.f32 0.0, %v767
    %v769 = vpop.f32.mrf.mxu0
    %v770 = vadd.f32 0.0, %v769
    %771 = vmatmul.bf16.gmra.mxu0 %v731
    %v772 = vpop.f32.mrf.mxu0
    %v773 = vadd.f32 0.0, %v772
    %v774 = vpop.f32.mrf.mxu0
    %v775 = vadd.f32 0.0, %v774
    %776 = vmatmul.bf16.gmra.mxu0 %v732
    %v777 = vpop.f32.mrf.mxu0
    %v778 = vadd.f32 0.0, %v777
    %v779 = vpop.f32.mrf.mxu0
    %v780 = vadd.f32 0.0, %v779
    %781 = vdwg.mxu0
    %v782 = vsel %vm89, 0.0, %v438
    %v783 = vsel %vm90, 0.0, %v440
    %v784 = vsel %vm91, 0.0, %v443
    %v785 = vsel %vm92, 0.0, %v445
    %v786 = vsel %vm93, 0.0, %v448
    %v787 = vsel %vm94, 0.0, %v450
    %v788 = vsel %vm95, 0.0, %v453
    %v789 = vsel %vm96, 0.0, %v455
    %v790 = vsel %vm97, 0.0, %v458
    %v791 = vsel %vm98, 0.0, %v460
    %v792 = vsel %vm99, 0.0, %v463
    %v793 = vsel %vm100, 0.0, %v465
    %v794 = vsel %vm101, 0.0, %v468
    %v795 = vsel %vm102, 0.0, %v470
    %v796 = vsel %vm103, 0.0, %v473
    %v797 = vsel %vm104, 0.0, %v475
    %798 = vadd.xlane.f32.xlu0 %v782
    %v799 = vpop.xlane.xlu0 %798
    %800 = vadd.xlane.f32.xlu0 %v783
    %v801 = vpop.xlane.xlu0 %800
    %802 = vadd.xlane.f32.xlu0 %v784
    %v803 = vpop.xlane.xlu0 %802
    %804 = vadd.xlane.f32.xlu0 %v785
    %v805 = vpop.xlane.xlu0 %804
    %806 = vadd.xlane.f32.xlu0 %v786
    %v807 = vpop.xlane.xlu0 %806
    %808 = vadd.xlane.f32.xlu0 %v787
    %v809 = vpop.xlane.xlu0 %808
    %810 = vadd.xlane.f32.xlu0 %v788
    %v811 = vpop.xlane.xlu0 %810
    %812 = vadd.xlane.f32.xlu0 %v789
    %v813 = vpop.xlane.xlu0 %812
    %814 = vadd.xlane.f32.xlu0 %v790
    %v815 = vpop.xlane.xlu0 %814
    %816 = vadd.xlane.f32.xlu0 %v791
    %v817 = vpop.xlane.xlu0 %816
    %818 = vadd.xlane.f32.xlu0 %v792
    %v819 = vpop.xlane.xlu0 %818
    %820 = vadd.xlane.f32.xlu0 %v793
    %v821 = vpop.xlane.xlu0 %820
    %822 = vadd.xlane.f32.xlu0 %v794
    %v823 = vpop.xlane.xlu0 %822
    %824 = vadd.xlane.f32.xlu0 %v795
    %v825 = vpop.xlane.xlu0 %824
    %826 = vadd.xlane.f32.xlu0 %v796
    %v827 = vpop.xlane.xlu0 %826
    %828 = vadd.xlane.f32.xlu0 %v797
    %v829 = vpop.xlane.xlu0 %828
    %vm830 = vcmp.eq.f32.partialorder %v799, 0.0
    %vm831 = vcmp.eq.f32.partialorder %v801, 0.0
    %vm832 = vcmp.eq.f32.partialorder %v803, 0.0
    %vm833 = vcmp.eq.f32.partialorder %v805, 0.0
    %vm834 = vcmp.eq.f32.partialorder %v807, 0.0
    %vm835 = vcmp.eq.f32.partialorder %v809, 0.0
    %vm836 = vcmp.eq.f32.partialorder %v811, 0.0
    %vm837 = vcmp.eq.f32.partialorder %v813, 0.0
    %vm838 = vcmp.eq.f32.partialorder %v815, 0.0
    %vm839 = vcmp.eq.f32.partialorder %v817, 0.0
    %vm840 = vcmp.eq.f32.partialorder %v819, 0.0
    %vm841 = vcmp.eq.f32.partialorder %v821, 0.0
    %vm842 = vcmp.eq.f32.partialorder %v823, 0.0
    %vm843 = vcmp.eq.f32.partialorder %v825, 0.0
    %vm844 = vcmp.eq.f32.partialorder %v827, 0.0
    %vm845 = vcmp.eq.f32.partialorder %v829, 0.0
    %v846 = vrcp.pop %v799
    %v847 = vrcp.pop %v801
    %v848 = vrcp.pop %v803
    %v849 = vrcp.pop %v805
    %v850 = vrcp.pop %v807
    %v851 = vrcp.pop %v809
    %v852 = vrcp.pop %v811
    %v853 = vrcp.pop %v813
    %v854 = vrcp.pop %v815
    %v855 = vrcp.pop %v817
    %v856 = vrcp.pop %v819
    %v857 = vrcp.pop %v821
    %v858 = vrcp.pop %v823
    %v859 = vrcp.pop %v825
    %v860 = vrcp.pop %v827
    %v861 = vrcp.pop %v829
    %v862 = vsel %vm830, 0.0, %v846
    %v863 = vsel %vm831, 0.0, %v847
    %v864 = vsel %vm832, 0.0, %v848
    %v865 = vsel %vm833, 0.0, %v849
    %v866 = vsel %vm834, 0.0, %v850
    %v867 = vsel %vm835, 0.0, %v851
    %v868 = vsel %vm836, 0.0, %v852
    %v869 = vsel %vm837, 0.0, %v853
    %v870 = vsel %vm838, 0.0, %v854
    %v871 = vsel %vm839, 0.0, %v855
    %v872 = vsel %vm840, 0.0, %v856
    %v873 = vsel %vm841, 0.0, %v857
    %v874 = vsel %vm842, 0.0, %v858
    %v875 = vsel %vm843, 0.0, %v859
    %v876 = vsel %vm844, 0.0, %v860
    %v877 = vsel %vm845, 0.0, %v861
    %v878 = vmul.f32 %v782, %v862
    %v879 = vmul.f32 %v783, %v863
    %v880 = vmul.f32 %v784, %v864
    %v881 = vmul.f32 %v785, %v865
    %v882 = vmul.f32 %v786, %v866
    %v883 = vmul.f32 %v787, %v867
    %v884 = vmul.f32 %v788, %v868
    %v885 = vmul.f32 %v789, %v869
    %v886 = vmul.f32 %v790, %v870
    %v887 = vmul.f32 %v791, %v871
    %v888 = vmul.f32 %v792, %v872
    %v889 = vmul.f32 %v793, %v873
    %v890 = vmul.f32 %v794, %v874
    %v891 = vmul.f32 %v795, %v875
    %v892 = vmul.f32 %v796, %v876
    %v893 = vmul.f32 %v797, %v877
    %v894 = vsel %vm89, 0.0, %v743
    %v895 = vsel %vm90, 0.0, %v745
    %v896 = vsel %vm91, 0.0, %v748
    %v897 = vsel %vm92, 0.0, %v750
    %v898 = vsel %vm93, 0.0, %v753
    %v899 = vsel %vm94, 0.0, %v755
    %v900 = vsel %vm95, 0.0, %v758
    %v901 = vsel %vm96, 0.0, %v760
    %v902 = vsel %vm97, 0.0, %v763
    %v903 = vsel %vm98, 0.0, %v765
    %v904 = vsel %vm99, 0.0, %v768
    %v905 = vsel %vm100, 0.0, %v770
    %v906 = vsel %vm101, 0.0, %v773
    %v907 = vsel %vm102, 0.0, %v775
    %v908 = vsel %vm103, 0.0, %v778
    %v909 = vsel %vm104, 0.0, %v780
    %910 = vadd.xlane.f32.xlu0 %v894
    %v911 = vpop.xlane.xlu0 %910
    %912 = vadd.xlane.f32.xlu0 %v895
    %v913 = vpop.xlane.xlu0 %912
    %914 = vadd.xlane.f32.xlu0 %v896
    %v915 = vpop.xlane.xlu0 %914
    %916 = vadd.xlane.f32.xlu0 %v897
    %v917 = vpop.xlane.xlu0 %916
    %918 = vadd.xlane.f32.xlu0 %v898
    %v919 = vpop.xlane.xlu0 %918
    %920 = vadd.xlane.f32.xlu0 %v899
    %v921 = vpop.xlane.xlu0 %920
    %922 = vadd.xlane.f32.xlu0 %v900
    %v923 = vpop.xlane.xlu0 %922
    %924 = vadd.xlane.f32.xlu0 %v901
    %v925 = vpop.xlane.xlu0 %924
    %926 = vadd.xlane.f32.xlu0 %v902
    %v927 = vpop.xlane.xlu0 %926
    %928 = vadd.xlane.f32.xlu0 %v903
    %v929 = vpop.xlane.xlu0 %928
    %930 = vadd.xlane.f32.xlu0 %v904
    %v931 = vpop.xlane.xlu0 %930
    %932 = vadd.xlane.f32.xlu0 %v905
    %v933 = vpop.xlane.xlu0 %932
    %934 = vadd.xlane.f32.xlu0 %v906
    %v935 = vpop.xlane.xlu0 %934
    %936 = vadd.xlane.f32.xlu0 %v907
    %v937 = vpop.xlane.xlu0 %936
    %938 = vadd.xlane.f32.xlu0 %v908
    %v939 = vpop.xlane.xlu0 %938
    %940 = vadd.xlane.f32.xlu0 %v909
    %v941 = vpop.xlane.xlu0 %940
    %vm942 = vcmp.eq.f32.partialorder %v911, 0.0
    %vm943 = vcmp.eq.f32.partialorder %v913, 0.0
    %vm944 = vcmp.eq.f32.partialorder %v915, 0.0
    %vm945 = vcmp.eq.f32.partialorder %v917, 0.0
    %vm946 = vcmp.eq.f32.partialorder %v919, 0.0
    %vm947 = vcmp.eq.f32.partialorder %v921, 0.0
    %vm948 = vcmp.eq.f32.partialorder %v923, 0.0
    %vm949 = vcmp.eq.f32.partialorder %v925, 0.0
    %vm950 = vcmp.eq.f32.partialorder %v927, 0.0
    %vm951 = vcmp.eq.f32.partialorder %v929, 0.0
    %vm952 = vcmp.eq.f32.partialorder %v931, 0.0
    %vm953 = vcmp.eq.f32.partialorder %v933, 0.0
    %vm954 = vcmp.eq.f32.partialorder %v935, 0.0
    %vm955 = vcmp.eq.f32.partialorder %v937, 0.0
    %vm956 = vcmp.eq.f32.partialorder %v939, 0.0
    %vm957 = vcmp.eq.f32.partialorder %v941, 0.0
    %v958 = vrcp.pop %v911
    %v959 = vrcp.pop %v913
    %v960 = vrcp.pop %v915
    %v961 = vrcp.pop %v917
    %v962 = vrcp.pop %v919
    %v963 = vrcp.pop %v921
    %v964 = vrcp.pop %v923
    %v965 = vrcp.pop %v925
    %v966 = vrcp.pop %v927
    %v967 = vrcp.pop %v929
    %v968 = vrcp.pop %v931
    %v969 = vrcp.pop %v933
    %v970 = vrcp.pop %v935
    %v971 = vrcp.pop %v937
    %v972 = vrcp.pop %v939
    %v973 = vrcp.pop %v941
    %v974 = vsel %vm942, 0.0, %v958
    %v975 = vsel %vm943, 0.0, %v959
    %v976 = vsel %vm944, 0.0, %v960
    %v977 = vsel %vm945, 0.0, %v961
    %v978 = vsel %vm946, 0.0, %v962
    %v979 = vsel %vm947, 0.0, %v963
    %v980 = vsel %vm948, 0.0, %v964
    %v981 = vsel %vm949, 0.0, %v965
    %v982 = vsel %vm950, 0.0, %v966
    %v983 = vsel %vm951, 0.0, %v967
    %v984 = vsel %vm952, 0.0, %v968
    %v985 = vsel %vm953, 0.0, %v969
    %v986 = vsel %vm954, 0.0, %v970
    %v987 = vsel %vm955, 0.0, %v971
    %v988 = vsel %vm956, 0.0, %v972
    %v989 = vsel %vm957, 0.0, %v973
    %v990 = vmul.f32 %v894, %v974
    %v991 = vmul.f32 %v895, %v975
    %v992 = vmul.f32 %v896, %v976
    %v993 = vmul.f32 %v897, %v977
    %v994 = vmul.f32 %v898, %v978
    %v995 = vmul.f32 %v899, %v979
    %v996 = vmul.f32 %v900, %v980
    %v997 = vmul.f32 %v901, %v981
    %v998 = vmul.f32 %v902, %v982
    %v999 = vmul.f32 %v903, %v983
    %v1000 = vmul.f32 %v904, %v984
    %v1001 = vmul.f32 %v905, %v985
    %v1002 = vmul.f32 %v906, %v986
    %v1003 = vmul.f32 %v907, %v987
    %v1004 = vmul.f32 %v908, %v988
    %v1005 = vmul.f32 %v909, %v989
    %s1006 = sld [smem:[#allocation2 + $0x200]]
    %v1007 = vstv %s1006
    %v1008 = vmul.f32 %v1007, %v106
    %v1009 = vmul.f32 %v1007, %v107
    %v1010 = vmul.f32 %v1007, %v108
    %v1011 = vmul.f32 %v1007, %v109
    %v1012 = vmul.f32 %v1007, %v110
    %v1013 = vmul.f32 %v1007, %v111
    %v1014 = vmul.f32 %v1007, %v112
    %v1015 = vmul.f32 %v1007, %v113
    %v1016 = vmul.f32 %v1007, %v114
    %v1017 = vmul.f32 %v1007, %v115
    %v1018 = vmul.f32 %v1007, %v116
    %v1019 = vmul.f32 %v1007, %v117
    %v1020 = vmul.f32 %v1007, %v118
    %v1021 = vmul.f32 %v1007, %v119
    %v1022 = vmul.f32 %v1007, %v120
    %v1023 = vmul.f32 %v1007, %v121
    %s1024 = sld [smem:[#allocation2 + $0x201]]
    %v1025 = vstv %s1024
    %v1026 = vmul.f32 %v1025, %v141
    %v1027 = vmul.f32 %v1025, %v142
    %v1028 = vmul.f32 %v1025, %v143
    %v1029 = vmul.f32 %v1025, %v144
    %v1030 = vmul.f32 %v1025, %v145
    %v1031 = vmul.f32 %v1025, %v146
    %v1032 = vmul.f32 %v1025, %v147
    %v1033 = vmul.f32 %v1025, %v148
    %v1034 = vmul.f32 %v1025, %v149
    %v1035 = vmul.f32 %v1025, %v150
    %v1036 = vmul.f32 %v1025, %v151
    %v1037 = vmul.f32 %v1025, %v152
    %v1038 = vmul.f32 %v1025, %v153
    %v1039 = vmul.f32 %v1025, %v154
    %v1040 = vmul.f32 %v1025, %v155
    %v1041 = vmul.f32 %v1025, %v156
    %v1042 = vadd.f32 %v1008, %v1026
    %v1043 = vadd.f32 %v1009, %v1027
    %v1044 = vadd.f32 %v1010, %v1028
    %v1045 = vadd.f32 %v1011, %v1029
    %v1046 = vadd.f32 %v1012, %v1030
    %v1047 = vadd.f32 %v1013, %v1031
    %v1048 = vadd.f32 %v1014, %v1032
    %v1049 = vadd.f32 %v1015, %v1033
    %v1050 = vadd.f32 %v1016, %v1034
    %v1051 = vadd.f32 %v1017, %v1035
    %v1052 = vadd.f32 %v1018, %v1036
    %v1053 = vadd.f32 %v1019, %v1037
    %v1054 = vadd.f32 %v1020, %v1038
    %v1055 = vadd.f32 %v1021, %v1039
    %v1056 = vadd.f32 %v1022, %v1040
    %v1057 = vadd.f32 %v1023, %v1041
    %s1058 = sld [smem:[#allocation2 + $0x202]]
    %v1059 = vstv %s1058
    %v1060 = vmul.f32 %v1059, %v192
    %v1061 = vmul.f32 %v1059, %v193
    %v1062 = vmul.f32 %v1059, %v194
    %v1063 = vmul.f32 %v1059, %v195
    %v1064 = vmul.f32 %v1059, %v196
    %v1065 = vmul.f32 %v1059, %v197
    %v1066 = vmul.f32 %v1059, %v198
    %v1067 = vmul.f32 %v1059, %v199
    %v1068 = vmul.f32 %v1059, %v200
    %v1069 = vmul.f32 %v1059, %v201
    %v1070 = vmul.f32 %v1059, %v202
    %v1071 = vmul.f32 %v1059, %v203
    %v1072 = vmul.f32 %v1059, %v204
    %v1073 = vmul.f32 %v1059, %v205
    %v1074 = vmul.f32 %v1059, %v206
    %v1075 = vmul.f32 %v1059, %v207
    %v1076 = vadd.f32 %v1042, %v1060
    %v1077 = vadd.f32 %v1043, %v1061
    %v1078 = vadd.f32 %v1044, %v1062
    %v1079 = vadd.f32 %v1045, %v1063
    %v1080 = vadd.f32 %v1046, %v1064
    %v1081 = vadd.f32 %v1047, %v1065
    %v1082 = vadd.f32 %v1048, %v1066
    %v1083 = vadd.f32 %v1049, %v1067
    %v1084 = vadd.f32 %v1050, %v1068
    %v1085 = vadd.f32 %v1051, %v1069
    %v1086 = vadd.f32 %v1052, %v1070
    %v1087 = vadd.f32 %v1053, %v1071
    %v1088 = vadd.f32 %v1054, %v1072
    %v1089 = vadd.f32 %v1055, %v1073
    %v1090 = vadd.f32 %v1056, %v1074
    %v1091 = vadd.f32 %v1057, %v1075
    %s1092 = sld [smem:[#allocation2 + $0x203]]
    %v1093 = vstv %s1092
    %v1094 = vmul.f32 %v1093, %v243
    %v1095 = vmul.f32 %v1093, %v244
    %v1096 = vmul.f32 %v1093, %v245
    %v1097 = vmul.f32 %v1093, %v246
    %v1098 = vmul.f32 %v1093, %v247
    %v1099 = vmul.f32 %v1093, %v248
    %v1100 = vmul.f32 %v1093, %v249
    %v1101 = vmul.f32 %v1093, %v250
    %v1102 = vmul.f32 %v1093, %v251
    %v1103 = vmul.f32 %v1093, %v252
    %v1104 = vmul.f32 %v1093, %v253
    %v1105 = vmul.f32 %v1093, %v254
    %v1106 = vmul.f32 %v1093, %v255
    %v1107 = vmul.f32 %v1093, %v256
    %v1108 = vmul.f32 %v1093, %v257
    %v1109 = vmul.f32 %v1093, %v258
    %v1110 = vadd.f32 %v1076, %v1094
    %v1111 = vadd.f32 %v1077, %v1095
    %v1112 = vadd.f32 %v1078, %v1096
    %v1113 = vadd.f32 %v1079, %v1097
    %v1114 = vadd.f32 %v1080, %v1098
    %v1115 = vadd.f32 %v1081, %v1099
    %v1116 = vadd.f32 %v1082, %v1100
    %v1117 = vadd.f32 %v1083, %v1101
    %v1118 = vadd.f32 %v1084, %v1102
    %v1119 = vadd.f32 %v1085, %v1103
    %v1120 = vadd.f32 %v1086, %v1104
    %v1121 = vadd.f32 %v1087, %v1105
    %v1122 = vadd.f32 %v1088, %v1106
    %v1123 = vadd.f32 %v1089, %v1107
    %v1124 = vadd.f32 %v1090, %v1108
    %v1125 = vadd.f32 %v1091, %v1109
    %v1126 = vpack.c.bf16 %v1111, %v1110
    %v1127 = vpack.c.bf16 %v1113, %v1112
    %v1128 = vpack.c.bf16 %v1115, %v1114
    %v1129 = vpack.c.bf16 %v1117, %v1116
    %v1130 = vpack.c.bf16 %v1119, %v1118
    %v1131 = vpack.c.bf16 %v1121, %v1120
    %v1132 = vpack.c.bf16 %v1123, %v1122
    %v1133 = vpack.c.bf16 %v1125, %v1124
    %v1134 = vpack.c.bf16 %v879, %v878
    %v1135 = vpack.c.bf16 %v881, %v880
    %v1136 = vpack.c.bf16 %v883, %v882
    %v1137 = vpack.c.bf16 %v885, %v884
    %v1138 = vpack.c.bf16 %v887, %v886
    %v1139 = vpack.c.bf16 %v889, %v888
    %v1140 = vpack.c.bf16 %v891, %v890
    %v1141 = vpack.c.bf16 %v893, %v892
    %1142 = vmatpush.bf16.msra.mxu0 %v1141
    %1143 = vmatpush.bf16.msra.mxu0 %v1140
    %1144 = vmatpush.bf16.msra.mxu0 %v1139
    %1145 = vmatpush.bf16.msra.mxu0 %v1138
    %1146 = vmatpush.bf16.msra.mxu0 %v1137
    %1147 = vmatpush.bf16.msra.mxu0 %v1136
    %1148 = vmatpush.bf16.msra.mxu0 %v1135
    %1149 = vmatpush.bf16.msra.mxu0 %v1134
    %1150 = vmatmul.bf16.gmra.mxu0 %v1126
    %v1151 = vpop.f32.mrf.mxu0
    %v1152 = vadd.f32 0.0, %v1151
    %v1153 = vpop.f32.mrf.mxu0
    %v1154 = vadd.f32 0.0, %v1153
    %1155 = vmatmul.bf16.gmra.mxu0 %v1127
    %v1156 = vpop.f32.mrf.mxu0
    %v1157 = vadd.f32 0.0, %v1156
    %v1158 = vpop.f32.mrf.mxu0
    %v1159 = vadd.f32 0.0, %v1158
    %1160 = vmatmul.bf16.gmra.mxu0 %v1128
    %v1161 = vpop.f32.mrf.mxu0
    %v1162 = vadd.f32 0.0, %v1161
    %v1163 = vpop.f32.mrf.mxu0
    %v1164 = vadd.f32 0.0, %v1163
    %1165 = vmatmul.bf16.gmra.mxu0 %v1129
    %v1166 = vpop.f32.mrf.mxu0
    %v1167 = vadd.f32 0.0, %v1166
    %v1168 = vpop.f32.mrf.mxu0
    %v1169 = vadd.f32 0.0, %v1168
    %1170 = vmatmul.bf16.gmra.mxu0 %v1130
    %v1171 = vpop.f32.mrf.mxu0
    %v1172 = vadd.f32 0.0, %v1171
    %v1173 = vpop.f32.mrf.mxu0
    %v1174 = vadd.f32 0.0, %v1173
    %1175 = vmatmul.bf16.gmra.mxu0 %v1131
    %v1176 = vpop.f32.mrf.mxu0
    %v1177 = vadd.f32 0.0, %v1176
    %v1178 = vpop.f32.mrf.mxu0
    %v1179 = vadd.f32 0.0, %v1178
    %1180 = vmatmul.bf16.gmra.mxu0 %v1132
    %v1181 = vpop.f32.mrf.mxu0
    %v1182 = vadd.f32 0.0, %v1181
    %v1183 = vpop.f32.mrf.mxu0
    %v1184 = vadd.f32 0.0, %v1183
    %1185 = vmatmul.bf16.gmra.mxu0 %v1133
    %v1186 = vpop.f32.mrf.mxu0
    %v1187 = vadd.f32 0.0, %v1186
    %v1188 = vpop.f32.mrf.mxu0
    %v1189 = vadd.f32 0.0, %v1188
    %1190 = vdwg.mxu0
    %s1191 = sld [smem:[#allocation2 + $0x280]]
    %v1192 = vstv %s1191
    %v1193 = vmul.f32 %v1192, %v106
    %v1194 = vmul.f32 %v1192, %v107
    %v1195 = vmul.f32 %v1192, %v108
    %v1196 = vmul.f32 %v1192, %v109
    %v1197 = vmul.f32 %v1192, %v110
    %v1198 = vmul.f32 %v1192, %v111
    %v1199 = vmul.f32 %v1192, %v112
    %v1200 = vmul.f32 %v1192, %v113
    %v1201 = vmul.f32 %v1192, %v114
    %v1202 = vmul.f32 %v1192, %v115
    %v1203 = vmul.f32 %v1192, %v116
    %v1204 = vmul.f32 %v1192, %v117
    %v1205 = vmul.f32 %v1192, %v118
    %v1206 = vmul.f32 %v1192, %v119
    %v1207 = vmul.f32 %v1192, %v120
    %v1208 = vmul.f32 %v1192, %v121
    %s1209 = sld [smem:[#allocation2 + $0x281]]
    %v1210 = vstv %s1209
    %v1211 = vmul.f32 %v1210, %v141
    %v1212 = vmul.f32 %v1210, %v142
    %v1213 = vmul.f32 %v1210, %v143
    %v1214 = vmul.f32 %v1210, %v144
    %v1215 = vmul.f32 %v1210, %v145
    %v1216 = vmul.f32 %v1210, %v146
    %v1217 = vmul.f32 %v1210, %v147
    %v1218 = vmul.f32 %v1210, %v148
    %v1219 = vmul.f32 %v1210, %v149
    %v1220 = vmul.f32 %v1210, %v150
    %v1221 = vmul.f32 %v1210, %v151
    %v1222 = vmul.f32 %v1210, %v152
    %v1223 = vmul.f32 %v1210, %v153
    %v1224 = vmul.f32 %v1210, %v154
    %v1225 = vmul.f32 %v1210, %v155
    %v1226 = vmul.f32 %v1210, %v156
    %v1227 = vadd.f32 %v1193, %v1211
    %v1228 = vadd.f32 %v1194, %v1212
    %v1229 = vadd.f32 %v1195, %v1213
    %v1230 = vadd.f32 %v1196, %v1214
    %v1231 = vadd.f32 %v1197, %v1215
    %v1232 = vadd.f32 %v1198, %v1216
    %v1233 = vadd.f32 %v1199, %v1217
    %v1234 = vadd.f32 %v1200, %v1218
    %v1235 = vadd.f32 %v1201, %v1219
    %v1236 = vadd.f32 %v1202, %v1220
    %v1237 = vadd.f32 %v1203, %v1221
    %v1238 = vadd.f32 %v1204, %v1222
    %v1239 = vadd.f32 %v1205, %v1223
    %v1240 = vadd.f32 %v1206, %v1224
    %v1241 = vadd.f32 %v1207, %v1225
    %v1242 = vadd.f32 %v1208, %v1226
    %s1243 = sld [smem:[#allocation2 + $0x282]]
    %v1244 = vstv %s1243
    %v1245 = vmul.f32 %v1244, %v192
    %v1246 = vmul.f32 %v1244, %v193
    %v1247 = vmul.f32 %v1244, %v194
    %v1248 = vmul.f32 %v1244, %v195
    %v1249 = vmul.f32 %v1244, %v196
    %v1250 = vmul.f32 %v1244, %v197
    %v1251 = vmul.f32 %v1244, %v198
    %v1252 = vmul.f32 %v1244, %v199
    %v1253 = vmul.f32 %v1244, %v200
    %v1254 = vmul.f32 %v1244, %v201
    %v1255 = vmul.f32 %v1244, %v202
    %v1256 = vmul.f32 %v1244, %v203
    %v1257 = vmul.f32 %v1244, %v204
    %v1258 = vmul.f32 %v1244, %v205
    %v1259 = vmul.f32 %v1244, %v206
    %v1260 = vmul.f32 %v1244, %v207
    %v1261 = vadd.f32 %v1227, %v1245
    %v1262 = vadd.f32 %v1228, %v1246
    %v1263 = vadd.f32 %v1229, %v1247
    %v1264 = vadd.f32 %v1230, %v1248
    %v1265 = vadd.f32 %v1231, %v1249
    %v1266 = vadd.f32 %v1232, %v1250
    %v1267 = vadd.f32 %v1233, %v1251
    %v1268 = vadd.f32 %v1234, %v1252
    %v1269 = vadd.f32 %v1235, %v1253
    %v1270 = vadd.f32 %v1236, %v1254
    %v1271 = vadd.f32 %v1237, %v1255
    %v1272 = vadd.f32 %v1238, %v1256
    %v1273 = vadd.f32 %v1239, %v1257
    %v1274 = vadd.f32 %v1240, %v1258
    %v1275 = vadd.f32 %v1241, %v1259
    %v1276 = vadd.f32 %v1242, %v1260
    %s1277 = sld [smem:[#allocation2 + $0x283]]
    %v1278 = vstv %s1277
    %v1279 = vmul.f32 %v1278, %v243
    %v1280 = vmul.f32 %v1278, %v244
    %v1281 = vmul.f32 %v1278, %v245
    %v1282 = vmul.f32 %v1278, %v246
    %v1283 = vmul.f32 %v1278, %v247
    %v1284 = vmul.f32 %v1278, %v248
    %v1285 = vmul.f32 %v1278, %v249
    %v1286 = vmul.f32 %v1278, %v250
    %v1287 = vmul.f32 %v1278, %v251
    %v1288 = vmul.f32 %v1278, %v252
    %v1289 = vmul.f32 %v1278, %v253
    %v1290 = vmul.f32 %v1278, %v254
    %v1291 = vmul.f32 %v1278, %v255
    %v1292 = vmul.f32 %v1278, %v256
    %v1293 = vmul.f32 %v1278, %v257
    %v1294 = vmul.f32 %v1278, %v258
    %v1295 = vadd.f32 %v1261, %v1279
    %v1296 = vadd.f32 %v1262, %v1280
    %v1297 = vadd.f32 %v1263, %v1281
    %v1298 = vadd.f32 %v1264, %v1282
    %v1299 = vadd.f32 %v1265, %v1283
    %v1300 = vadd.f32 %v1266, %v1284
    %v1301 = vadd.f32 %v1267, %v1285
    %v1302 = vadd.f32 %v1268, %v1286
    %v1303 = vadd.f32 %v1269, %v1287
    %v1304 = vadd.f32 %v1270, %v1288
    %v1305 = vadd.f32 %v1271, %v1289
    %v1306 = vadd.f32 %v1272, %v1290
    %v1307 = vadd.f32 %v1273, %v1291
    %v1308 = vadd.f32 %v1274, %v1292
    %v1309 = vadd.f32 %v1275, %v1293
    %v1310 = vadd.f32 %v1276, %v1294
    %v1311 = vpack.c.bf16 %v1296, %v1295
    %v1312 = vpack.c.bf16 %v1298, %v1297
    %v1313 = vpack.c.bf16 %v1300, %v1299
    %v1314 = vpack.c.bf16 %v1302, %v1301
    %v1315 = vpack.c.bf16 %v1304, %v1303
    %v1316 = vpack.c.bf16 %v1306, %v1305
    %v1317 = vpack.c.bf16 %v1308, %v1307
    %v1318 = vpack.c.bf16 %v1310, %v1309
    %v1319 = vpack.c.bf16 %v991, %v990
    %v1320 = vpack.c.bf16 %v993, %v992
    %v1321 = vpack.c.bf16 %v995, %v994
    %v1322 = vpack.c.bf16 %v997, %v996
    %v1323 = vpack.c.bf16 %v999, %v998
    %v1324 = vpack.c.bf16 %v1001, %v1000
    %v1325 = vpack.c.bf16 %v1003, %v1002
    %v1326 = vpack.c.bf16 %v1005, %v1004
    %1327 = vmatpush.bf16.msra.mxu0 %v1326
    %1328 = vmatpush.bf16.msra.mxu0 %v1325
    %1329 = vmatpush.bf16.msra.mxu0 %v1324
    %1330 = vmatpush.bf16.msra.mxu0 %v1323
    %1331 = vmatpush.bf16.msra.mxu0 %v1322
    %1332 = vmatpush.bf16.msra.mxu0 %v1321
    %1333 = vmatpush.bf16.msra.mxu0 %v1320
    %1334 = vmatpush.bf16.msra.mxu0 %v1319
    %1335 = vmatmul.bf16.gmra.mxu0 %v1311
    %v1336 = vpop.f32.mrf.mxu0
    %v1337 = vadd.f32 0.0, %v1336
    %v1338 = vpop.f32.mrf.mxu0
    %v1339 = vadd.f32 0.0, %v1338
    %1340 = vmatmul.bf16.gmra.mxu0 %v1312
    %v1341 = vpop.f32.mrf.mxu0
    %v1342 = vadd.f32 0.0, %v1341
    %v1343 = vpop.f32.mrf.mxu0
    %v1344 = vadd.f32 0.0, %v1343
    %1345 = vmatmul.bf16.gmra.mxu0 %v1313
    %v1346 = vpop.f32.mrf.mxu0
    %v1347 = vadd.f32 0.0, %v1346
    %v1348 = vpop.f32.mrf.mxu0
    %v1349 = vadd.f32 0.0, %v1348
    %1350 = vmatmul.bf16.gmra.mxu0 %v1314
    %v1351 = vpop.f32.mrf.mxu0
    %v1352 = vadd.f32 0.0, %v1351
    %v1353 = vpop.f32.mrf.mxu0
    %v1354 = vadd.f32 0.0, %v1353
    %1355 = vmatmul.bf16.gmra.mxu0 %v1315
    %v1356 = vpop.f32.mrf.mxu0
    %v1357 = vadd.f32 0.0, %v1356
    %v1358 = vpop.f32.mrf.mxu0
    %v1359 = vadd.f32 0.0, %v1358
    %1360 = vmatmul.bf16.gmra.mxu0 %v1316
    %v1361 = vpop.f32.mrf.mxu0
    %v1362 = vadd.f32 0.0, %v1361
    %v1363 = vpop.f32.mrf.mxu0
    %v1364 = vadd.f32 0.0, %v1363
    %1365 = vmatmul.bf16.gmra.mxu0 %v1317
    %v1366 = vpop.f32.mrf.mxu0
    %v1367 = vadd.f32 0.0, %v1366
    %v1368 = vpop.f32.mrf.mxu0
    %v1369 = vadd.f32 0.0, %v1368
    %1370 = vmatmul.bf16.gmra.mxu0 %v1318
    %v1371 = vpop.f32.mrf.mxu0
    %v1372 = vadd.f32 0.0, %v1371
    %v1373 = vpop.f32.mrf.mxu0
    %v1374 = vadd.f32 0.0, %v1373
    %1375 = vdwg.mxu0
    %v1376 = vsel %vm89, 0.0, %v1152
    %v1377 = vsel %vm90, 0.0, %v1154
    %v1378 = vsel %vm91, 0.0, %v1157
    %v1379 = vsel %vm92, 0.0, %v1159
    %v1380 = vsel %vm93, 0.0, %v1162
    %v1381 = vsel %vm94, 0.0, %v1164
    %v1382 = vsel %vm95, 0.0, %v1167
    %v1383 = vsel %vm96, 0.0, %v1169
    %v1384 = vsel %vm97, 0.0, %v1172
    %v1385 = vsel %vm98, 0.0, %v1174
    %v1386 = vsel %vm99, 0.0, %v1177
    %v1387 = vsel %vm100, 0.0, %v1179
    %v1388 = vsel %vm101, 0.0, %v1182
    %v1389 = vsel %vm102, 0.0, %v1184
    %v1390 = vsel %vm103, 0.0, %v1187
    %v1391 = vsel %vm104, 0.0, %v1189
    %1392 = vadd.xlane.f32.xlu0 %v1376
    %v1393 = vpop.xlane.xlu0 %1392
    %1394 = vadd.xlane.f32.xlu0 %v1377
    %v1395 = vpop.xlane.xlu0 %1394
    %1396 = vadd.xlane.f32.xlu0 %v1378
    %v1397 = vpop.xlane.xlu0 %1396
    %1398 = vadd.xlane.f32.xlu0 %v1379
    %v1399 = vpop.xlane.xlu0 %1398
    %1400 = vadd.xlane.f32.xlu0 %v1380
    %v1401 = vpop.xlane.xlu0 %1400
    %1402 = vadd.xlane.f32.xlu0 %v1381
    %v1403 = vpop.xlane.xlu0 %1402
    %1404 = vadd.xlane.f32.xlu0 %v1382
    %v1405 = vpop.xlane.xlu0 %1404
    %1406 = vadd.xlane.f32.xlu0 %v1383
    %v1407 = vpop.xlane.xlu0 %1406
    %1408 = vadd.xlane.f32.xlu0 %v1384
    %v1409 = vpop.xlane.xlu0 %1408
    %1410 = vadd.xlane.f32.xlu0 %v1385
    %v1411 = vpop.xlane.xlu0 %1410
    %1412 = vadd.xlane.f32.xlu0 %v1386
    %v1413 = vpop.xlane.xlu0 %1412
    %1414 = vadd.xlane.f32.xlu0 %v1387
    %v1415 = vpop.xlane.xlu0 %1414
    %1416 = vadd.xlane.f32.xlu0 %v1388
    %v1417 = vpop.xlane.xlu0 %1416
    %1418 = vadd.xlane.f32.xlu0 %v1389
    %v1419 = vpop.xlane.xlu0 %1418
    %1420 = vadd.xlane.f32.xlu0 %v1390
    %v1421 = vpop.xlane.xlu0 %1420
    %1422 = vadd.xlane.f32.xlu0 %v1391
    %v1423 = vpop.xlane.xlu0 %1422
    %vm1424 = vcmp.eq.f32.partialorder %v1393, 0.0
    %vm1425 = vcmp.eq.f32.partialorder %v1395, 0.0
    %vm1426 = vcmp.eq.f32.partialorder %v1397, 0.0
    %vm1427 = vcmp.eq.f32.partialorder %v1399, 0.0
    %vm1428 = vcmp.eq.f32.partialorder %v1401, 0.0
    %vm1429 = vcmp.eq.f32.partialorder %v1403, 0.0
    %vm1430 = vcmp.eq.f32.partialorder %v1405, 0.0
    %vm1431 = vcmp.eq.f32.partialorder %v1407, 0.0
    %vm1432 = vcmp.eq.f32.partialorder %v1409, 0.0
    %vm1433 = vcmp.eq.f32.partialorder %v1411, 0.0
    %vm1434 = vcmp.eq.f32.partialorder %v1413, 0.0
    %vm1435 = vcmp.eq.f32.partialorder %v1415, 0.0
    %vm1436 = vcmp.eq.f32.partialorder %v1417, 0.0
    %vm1437 = vcmp.eq.f32.partialorder %v1419, 0.0
    %vm1438 = vcmp.eq.f32.partialorder %v1421, 0.0
    %vm1439 = vcmp.eq.f32.partialorder %v1423, 0.0
    %v1440 = vrcp.pop %v1393
    %v1441 = vrcp.pop %v1395
    %v1442 = vrcp.pop %v1397
    %v1443 = vrcp.pop %v1399
    %v1444 = vrcp.pop %v1401
    %v1445 = vrcp.pop %v1403
    %v1446 = vrcp.pop %v1405
    %v1447 = vrcp.pop %v1407
    %v1448 = vrcp.pop %v1409
    %v1449 = vrcp.pop %v1411
    %v1450 = vrcp.pop %v1413
    %v1451 = vrcp.pop %v1415
    %v1452 = vrcp.pop %v1417
    %v1453 = vrcp.pop %v1419
    %v1454 = vrcp.pop %v1421
    %v1455 = vrcp.pop %v1423
    %v1456 = vsel %vm1424, 0.0, %v1440
    %v1457 = vsel %vm1425, 0.0, %v1441
    %v1458 = vsel %vm1426, 0.0, %v1442
    %v1459 = vsel %vm1427, 0.0, %v1443
    %v1460 = vsel %vm1428, 0.0, %v1444
    %v1461 = vsel %vm1429, 0.0, %v1445
    %v1462 = vsel %vm1430, 0.0, %v1446
    %v1463 = vsel %vm1431, 0.0, %v1447
    %v1464 = vsel %vm1432, 0.0, %v1448
    %v1465 = vsel %vm1433, 0.0, %v1449
    %v1466 = vsel %vm1434, 0.0, %v1450
    %v1467 = vsel %vm1435, 0.0, %v1451
    %v1468 = vsel %vm1436, 0.0, %v1452
    %v1469 = vsel %vm1437, 0.0, %v1453
    %v1470 = vsel %vm1438, 0.0, %v1454
    %v1471 = vsel %vm1439, 0.0, %v1455
    %v1472 = vmul.f32 %v1376, %v1456
    %v1473 = vmul.f32 %v1377, %v1457
    %v1474 = vmul.f32 %v1378, %v1458
    %v1475 = vmul.f32 %v1379, %v1459
    %v1476 = vmul.f32 %v1380, %v1460
    %v1477 = vmul.f32 %v1381, %v1461
    %v1478 = vmul.f32 %v1382, %v1462
    %v1479 = vmul.f32 %v1383, %v1463
    %v1480 = vmul.f32 %v1384, %v1464
    %v1481 = vmul.f32 %v1385, %v1465
    %v1482 = vmul.f32 %v1386, %v1466
    %v1483 = vmul.f32 %v1387, %v1467
    %v1484 = vmul.f32 %v1388, %v1468
    %v1485 = vmul.f32 %v1389, %v1469
    %v1486 = vmul.f32 %v1390, %v1470
    %v1487 = vmul.f32 %v1391, %v1471
    %v1488 = vsel %vm89, 0.0, %v1337
    %v1489 = vsel %vm90, 0.0, %v1339
    %v1490 = vsel %vm91, 0.0, %v1342
    %v1491 = vsel %vm92, 0.0, %v1344
    %v1492 = vsel %vm93, 0.0, %v1347
    %v1493 = vsel %vm94, 0.0, %v1349
    %v1494 = vsel %vm95, 0.0, %v1352
    %v1495 = vsel %vm96, 0.0, %v1354
    %v1496 = vsel %vm97, 0.0, %v1357
    %v1497 = vsel %vm98, 0.0, %v1359
    %v1498 = vsel %vm99, 0.0, %v1362
    %v1499 = vsel %vm100, 0.0, %v1364
    %v1500 = vsel %vm101, 0.0, %v1367
    %v1501 = vsel %vm102, 0.0, %v1369
    %v1502 = vsel %vm103, 0.0, %v1372
    %v1503 = vsel %vm104, 0.0, %v1374
    %1504 = vadd.xlane.f32.xlu0 %v1488
    %v1505 = vpop.xlane.xlu0 %1504
    %1506 = vadd.xlane.f32.xlu0 %v1489
    %v1507 = vpop.xlane.xlu0 %1506
    %1508 = vadd.xlane.f32.xlu0 %v1490
    %v1509 = vpop.xlane.xlu0 %1508
    %1510 = vadd.xlane.f32.xlu0 %v1491
    %v1511 = vpop.xlane.xlu0 %1510
    %1512 = vadd.xlane.f32.xlu0 %v1492
    %v1513 = vpop.xlane.xlu0 %1512
    %1514 = vadd.xlane.f32.xlu0 %v1493
    %v1515 = vpop.xlane.xlu0 %1514
    %1516 = vadd.xlane.f32.xlu0 %v1494
    %v1517 = vpop.xlane.xlu0 %1516
    %1518 = vadd.xlane.f32.xlu0 %v1495
    %v1519 = vpop.xlane.xlu0 %1518
    %1520 = vadd.xlane.f32.xlu0 %v1496
    %v1521 = vpop.xlane.xlu0 %1520
    %1522 = vadd.xlane.f32.xlu0 %v1497
    %v1523 = vpop.xlane.xlu0 %1522
    %1524 = vadd.xlane.f32.xlu0 %v1498
    %v1525 = vpop.xlane.xlu0 %1524
    %1526 = vadd.xlane.f32.xlu0 %v1499
    %v1527 = vpop.xlane.xlu0 %1526
    %1528 = vadd.xlane.f32.xlu0 %v1500
    %v1529 = vpop.xlane.xlu0 %1528
    %1530 = vadd.xlane.f32.xlu0 %v1501
    %v1531 = vpop.xlane.xlu0 %1530
    %1532 = vadd.xlane.f32.xlu0 %v1502
    %v1533 = vpop.xlane.xlu0 %1532
    %1534 = vadd.xlane.f32.xlu0 %v1503
    %v1535 = vpop.xlane.xlu0 %1534
    %vm1536 = vcmp.eq.f32.partialorder %v1505, 0.0
    %vm1537 = vcmp.eq.f32.partialorder %v1507, 0.0
    %vm1538 = vcmp.eq.f32.partialorder %v1509, 0.0
    %vm1539 = vcmp.eq.f32.partialorder %v1511, 0.0
    %vm1540 = vcmp.eq.f32.partialorder %v1513, 0.0
    %vm1541 = vcmp.eq.f32.partialorder %v1515, 0.0
    %vm1542 = vcmp.eq.f32.partialorder %v1517, 0.0
    %vm1543 = vcmp.eq.f32.partialorder %v1519, 0.0
    %vm1544 = vcmp.eq.f32.partialorder %v1521, 0.0
    %vm1545 = vcmp.eq.f32.partialorder %v1523, 0.0
    %vm1546 = vcmp.eq.f32.partialorder %v1525, 0.0
    %vm1547 = vcmp.eq.f32.partialorder %v1527, 0.0
    %vm1548 = vcmp.eq.f32.partialorder %v1529, 0.0
    %vm1549 = vcmp.eq.f32.partialorder %v1531, 0.0
    %vm1550 = vcmp.eq.f32.partialorder %v1533, 0.0
    %vm1551 = vcmp.eq.f32.partialorder %v1535, 0.0
    %v1552 = vrcp.pop %v1505
    %v1553 = vrcp.pop %v1507
    %v1554 = vrcp.pop %v1509
    %v1555 = vrcp.pop %v1511
    %v1556 = vrcp.pop %v1513
    %v1557 = vrcp.pop %v1515
    %v1558 = vrcp.pop %v1517
    %v1559 = vrcp.pop %v1519
    %v1560 = vrcp.pop %v1521
    %v1561 = vrcp.pop %v1523
    %v1562 = vrcp.pop %v1525
    %v1563 = vrcp.pop %v1527
    %v1564 = vrcp.pop %v1529
    %v1565 = vrcp.pop %v1531
    %v1566 = vrcp.pop %v1533
    %v1567 = vrcp.pop %v1535
    %v1568 = vsel %vm1536, 0.0, %v1552
    %v1569 = vsel %vm1537, 0.0, %v1553
    %v1570 = vsel %vm1538, 0.0, %v1554
    %v1571 = vsel %vm1539, 0.0, %v1555
    %v1572 = vsel %vm1540, 0.0, %v1556
    %v1573 = vsel %vm1541, 0.0, %v1557
    %v1574 = vsel %vm1542, 0.0, %v1558
    %v1575 = vsel %vm1543, 0.0, %v1559
    %v1576 = vsel %vm1544, 0.0, %v1560
    %v1577 = vsel %vm1545, 0.0, %v1561
    %v1578 = vsel %vm1546, 0.0, %v1562
    %v1579 = vsel %vm1547, 0.0, %v1563
    %v1580 = vsel %vm1548, 0.0, %v1564
    %v1581 = vsel %vm1549, 0.0, %v1565
    %v1582 = vsel %vm1550, 0.0, %v1566
    %v1583 = vsel %vm1551, 0.0, %v1567
    %v1584 = vmul.f32 %v1488, %v1568
    %v1585 = vmul.f32 %v1489, %v1569
    %v1586 = vmul.f32 %v1490, %v1570
    %v1587 = vmul.f32 %v1491, %v1571
    %v1588 = vmul.f32 %v1492, %v1572
    %v1589 = vmul.f32 %v1493, %v1573
    %v1590 = vmul.f32 %v1494, %v1574
    %v1591 = vmul.f32 %v1495, %v1575
    %v1592 = vmul.f32 %v1496, %v1576
    %v1593 = vmul.f32 %v1497, %v1577
    %v1594 = vmul.f32 %v1498, %v1578
    %v1595 = vmul.f32 %v1499, %v1579
    %v1596 = vmul.f32 %v1500, %v1580
    %v1597 = vmul.f32 %v1501, %v1581
    %v1598 = vmul.f32 %v1502, %v1582
    %v1599 = vmul.f32 %v1503, %v1583
    %v1600 = vld [vmem:[%s2] sm:$0xff]
    %v1601 = vld [vmem:[%s2 + $0x8] sm:$0xff]
    %v1602 = vld [vmem:[%s2 + $0x10] sm:$0xff]
    %v1603 = vld [vmem:[%s2 + $0x18] sm:$0xff]
    %v1604 = vld [vmem:[%s2 + $0x20] sm:$0xff]
    %v1605 = vld [vmem:[%s2 + $0x28] sm:$0xff]
    %v1606 = vld [vmem:[%s2 + $0x30] sm:$0xff]
    %v1607 = vld [vmem:[%s2 + $0x38] sm:$0xff]
    %v1608 = vld [vmem:[%s2 + $0x40] sm:$0xff]
    %v1609 = vld [vmem:[%s2 + $0x48] sm:$0xff]
    %v1610 = vld [vmem:[%s2 + $0x50] sm:$0xff]
    %v1611 = vld [vmem:[%s2 + $0x58] sm:$0xff]
    %v1612 = vld [vmem:[%s2 + $0x60] sm:$0xff]
    %v1613 = vld [vmem:[%s2 + $0x68] sm:$0xff]
    %v1614 = vld [vmem:[%s2 + $0x70] sm:$0xff]
    %v1615 = vld [vmem:[%s2 + $0x78] sm:$0xff]
    %v1616 = vld [vmem:[%s3] sm:$0xff]
    %v1617 = vld [vmem:[%s3 + $0x8] sm:$0xff]
    %vm1618 = vcmask 130048
    %v1620 = vsel %vm1618, %v1600, 0
    %v1623 = vsel %vm1618, %v1601, 0
    %v1626 = vsel %vm1618, %v1602, 0
    %v1629 = vsel %vm1618, %v1603, 0
    %v1632 = vsel %vm1618, %v1604, 0
    %v1635 = vsel %vm1618, %v1605, 0
    %v1638 = vsel %vm1618, %v1606, 0
    %v1641 = vsel %vm1618, %v1607, 0
    %v1644 = vsel %vm1618, %v1608, 0
    %v1647 = vsel %vm1618, %v1609, 0
    %v1650 = vsel %vm1618, %v1610, 0
    %v1653 = vsel %vm1618, %v1611, 0
    %v1656 = vsel %vm1618, %v1612, 0
    %v1659 = vsel %vm1618, %v1613, 0
    %v1662 = vsel %vm1618, %v1614, 0
    %v1665 = vsel %vm1618, %v1615, 0
    %1667 = vmatpush.msra.mxu0 0.0
    %1668 = vmatpush.msra.mxu0 0.0
    %1669 = vmatpush.msra.mxu0 0.0
    %1670 = vmatpush.msra.mxu0 0.0
    %1671 = vmatpush.msra.mxu0 0.0
    %1672 = vmatpush.msra.mxu0 0.0
    %1673 = vmatpush.msra.mxu0 0.0
    %1674 = vmatpush.msra.mxu0 0.0
    %1675 = vmatpush.msra.mxu0 0.0
    %1676 = vmatpush.msra.mxu0 0.0
    %1677 = vmatpush.msra.mxu0 0.0
    %1678 = vmatpush.msra.mxu0 0.0
    %1679 = vmatpush.msra.mxu0 0.0
    %1680 = vmatpush.msra.mxu0 0.0
    %1681 = vmatpush.msra.mxu0 %v1617
    %1682 = vmatpush.msra.mxu0 %v1616
    %1683 = vmatmul.f32.gmra.mxu0 %v1620
    %v1684 = vpop.f32.mrf.mxu0
    %v1685 = vadd.f32 0.0, %v1684
    %1686 = vmatmul.f32.gmra.mxu0 %v1623
    %v1687 = vpop.f32.mrf.mxu0
    %v1688 = vadd.f32 0.0, %v1687
    %1689 = vmatmul.f32.gmra.mxu0 %v1626
    %v1690 = vpop.f32.mrf.mxu0
    %v1691 = vadd.f32 0.0, %v1690
    %1692 = vmatmul.f32.gmra.mxu0 %v1629
    %v1693 = vpop.f32.mrf.mxu0
    %v1694 = vadd.f32 0.0, %v1693
    %1695 = vmatmul.f32.gmra.mxu0 %v1632
    %v1696 = vpop.f32.mrf.mxu0
    %v1697 = vadd.f32 0.0, %v1696
    %1698 = vmatmul.f32.gmra.mxu0 %v1635
    %v1699 = vpop.f32.mrf.mxu0
    %v1700 = vadd.f32 0.0, %v1699
    %1701 = vmatmul.f32.gmra.mxu0 %v1638
    %v1702 = vpop.f32.mrf.mxu0
    %v1703 = vadd.f32 0.0, %v1702
    %1704 = vmatmul.f32.gmra.mxu0 %v1641
    %v1705 = vpop.f32.mrf.mxu0
    %v1706 = vadd.f32 0.0, %v1705
    %1707 = vmatmul.f32.gmra.mxu0 %v1644
    %v1708 = vpop.f32.mrf.mxu0
    %v1709 = vadd.f32 0.0, %v1708
    %1710 = vmatmul.f32.gmra.mxu0 %v1647
    %v1711 = vpop.f32.mrf.mxu0
    %v1712 = vadd.f32 0.0, %v1711
    %1713 = vmatmul.f32.gmra.mxu0 %v1650
    %v1714 = vpop.f32.mrf.mxu0
    %v1715 = vadd.f32 0.0, %v1714
    %1716 = vmatmul.f32.gmra.mxu0 %v1653
    %v1717 = vpop.f32.mrf.mxu0
    %v1718 = vadd.f32 0.0, %v1717
    %1719 = vmatmul.f32.gmra.mxu0 %v1656
    %v1720 = vpop.f32.mrf.mxu0
    %v1721 = vadd.f32 0.0, %v1720
    %1722 = vmatmul.f32.gmra.mxu0 %v1659
    %v1723 = vpop.f32.mrf.mxu0
    %v1724 = vadd.f32 0.0, %v1723
    %1725 = vmatmul.f32.gmra.mxu0 %v1662
    %v1726 = vpop.f32.mrf.mxu0
    %v1727 = vadd.f32 0.0, %v1726
    %1728 = vmatmul.f32.gmra.mxu0 %v1665
    %v1729 = vpop.f32.mrf.mxu0
    %v1730 = vadd.f32 0.0, %v1729
    %1731 = vdwg.mxu0
    %v1732 = vld [vmem:[%s4] sm:$0x1]
    %v1734 = vperm.slane %v1732, 0
    %1736 = vmatpush.msra.mxu0 %v1730
    %1737 = vmatpush.msra.mxu0 %v1727
    %1738 = vmatpush.msra.mxu0 %v1724
    %1739 = vmatpush.msra.mxu0 %v1721
    %1740 = vmatpush.msra.mxu0 %v1718
    %1741 = vmatpush.msra.mxu0 %v1715
    %1742 = vmatpush.msra.mxu0 %v1712
    %1743 = vmatpush.msra.mxu0 %v1709
    %1744 = vmatpush.msra.mxu0 %v1706
    %1745 = vmatpush.msra.mxu0 %v1703
    %1746 = vmatpush.msra.mxu0 %v1700
    %1747 = vmatpush.msra.mxu0 %v1697
    %1748 = vmatpush.msra.mxu0 %v1694
    %1749 = vmatpush.msra.mxu0 %v1691
    %1750 = vmatpush.msra.mxu0 %v1688
    %1751 = vmatpush.msra.mxu0 %v1685
    %1752 = vmatmul.f32.gmra.mxu0 %v1472
    %v1753 = vpop.f32.mrf.mxu0
    %v1754 = vadd.f32 %v1734, %v1753
    %1755 = vmatmul.f32.gmra.mxu0 %v1473
    %v1756 = vpop.f32.mrf.mxu0
    %v1757 = vadd.f32 %v1734, %v1756
    %1758 = vmatmul.f32.gmra.mxu0 %v1474
    %v1759 = vpop.f32.mrf.mxu0
    %v1760 = vadd.f32 %v1734, %v1759
    %1761 = vmatmul.f32.gmra.mxu0 %v1475
    %v1762 = vpop.f32.mrf.mxu0
    %v1763 = vadd.f32 %v1734, %v1762
    %1764 = vmatmul.f32.gmra.mxu0 %v1476
    %v1765 = vpop.f32.mrf.mxu0
    %v1766 = vadd.f32 %v1734, %v1765
    %1767 = vmatmul.f32.gmra.mxu0 %v1477
    %v1768 = vpop.f32.mrf.mxu0
    %v1769 = vadd.f32 %v1734, %v1768
    %1770 = vmatmul.f32.gmra.mxu0 %v1478
    %v1771 = vpop.f32.mrf.mxu0
    %v1772 = vadd.f32 %v1734, %v1771
    %1773 = vmatmul.f32.gmra.mxu0 %v1479
    %v1774 = vpop.f32.mrf.mxu0
    %v1775 = vadd.f32 %v1734, %v1774
    %1776 = vmatmul.f32.gmra.mxu0 %v1480
    %v1777 = vpop.f32.mrf.mxu0
    %v1778 = vadd.f32 %v1734, %v1777
    %1779 = vmatmul.f32.gmra.mxu0 %v1481
    %v1780 = vpop.f32.mrf.mxu0
    %v1781 = vadd.f32 %v1734, %v1780
    %1782 = vmatmul.f32.gmra.mxu0 %v1482
    %v1783 = vpop.f32.mrf.mxu0
    %v1784 = vadd.f32 %v1734, %v1783
    %1785 = vmatmul.f32.gmra.mxu0 %v1483
    %v1786 = vpop.f32.mrf.mxu0
    %v1787 = vadd.f32 %v1734, %v1786
    %1788 = vmatmul.f32.gmra.mxu0 %v1484
    %v1789 = vpop.f32.mrf.mxu0
    %v1790 = vadd.f32 %v1734, %v1789
    %1791 = vmatmul.f32.gmra.mxu0 %v1485
    %v1792 = vpop.f32.mrf.mxu0
    %v1793 = vadd.f32 %v1734, %v1792
    %1794 = vmatmul.f32.gmra.mxu0 %v1486
    %v1795 = vpop.f32.mrf.mxu0
    %v1796 = vadd.f32 %v1734, %v1795
    %1797 = vmatmul.f32.gmra.mxu0 %v1487
    %v1798 = vpop.f32.mrf.mxu0
    %v1799 = vadd.f32 %v1734, %v1798
    %1800 = vdwg.mxu0
    %v1801 = vmax.f32 %v1754, 0.0
    %v1802 = vmax.f32 %v1757, 0.0
    %v1803 = vmax.f32 %v1760, 0.0
    %v1804 = vmax.f32 %v1763, 0.0
    %v1805 = vmax.f32 %v1766, 0.0
    %v1806 = vmax.f32 %v1769, 0.0
    %v1807 = vmax.f32 %v1772, 0.0
    %v1808 = vmax.f32 %v1775, 0.0
    %v1809 = vmax.f32 %v1778, 0.0
    %v1810 = vmax.f32 %v1781, 0.0
    %v1811 = vmax.f32 %v1784, 0.0
    %v1812 = vmax.f32 %v1787, 0.0
    %v1813 = vmax.f32 %v1790, 0.0
    %v1814 = vmax.f32 %v1793, 0.0
    %v1815 = vmax.f32 %v1796, 0.0
    %v1816 = vmax.f32 %v1799, 0.0
    %v1817 = vld [vmem:[%s5] sm:$0xff]
    %1818 = vmatpush.msra.mxu0 %v1816
    %1819 = vmatpush.msra.mxu0 %v1815
    %1820 = vmatpush.msra.mxu0 %v1814
    %1821 = vmatpush.msra.mxu0 %v1813
    %1822 = vmatpush.msra.mxu0 %v1812
    %1823 = vmatpush.msra.mxu0 %v1811
    %1824 = vmatpush.msra.mxu0 %v1810
    %1825 = vmatpush.msra.mxu0 %v1809
    %1826 = vmatpush.msra.mxu0 %v1808
    %1827 = vmatpush.msra.mxu0 %v1807
    %1828 = vmatpush.msra.mxu0 %v1806
    %1829 = vmatpush.msra.mxu0 %v1805
    %1830 = vmatpush.msra.mxu0 %v1804
    %1831 = vmatpush.msra.mxu0 %v1803
    %1832 = vmatpush.msra.mxu0 %v1802
    %1833 = vmatpush.msra.mxu0 %v1801
    %1834 = vmatmul.f32.gmra.mxu0 %v1817
    %v1835 = vpop.f32.mrf.mxu0
    %v1836 = vadd.f32 0.0, %v1835
    %1837 = vdwg.mxu0
    %v1838 = vld [vmem:[%s6] sm:$0xff]
    %v1839 = vld [vmem:[%s6 + $0x8] sm:$0xff]
    %1840 = vmatpush.msra.mxu0 %v1730
    %1841 = vmatpush.msra.mxu0 %v1727
    %1842 = vmatpush.msra.mxu0 %v1724
    %1843 = vmatpush.msra.mxu0 %v1721
    %1844 = vmatpush.msra.mxu0 %v1718
    %1845 = vmatpush.msra.mxu0 %v1715
    %1846 = vmatpush.msra.mxu0 %v1712
    %1847 = vmatpush.msra.mxu0 %v1709
    %1848 = vmatpush.msra.mxu0 %v1706
    %1849 = vmatpush.msra.mxu0 %v1703
    %1850 = vmatpush.msra.mxu0 %v1700
    %1851 = vmatpush.msra.mxu0 %v1697
    %1852 = vmatpush.msra.mxu0 %v1694
    %1853 = vmatpush.msra.mxu0 %v1691
    %1854 = vmatpush.msra.mxu0 %v1688
    %1855 = vmatpush.msra.mxu0 %v1685
    %1856 = vmatmul.f32.gmra.mxu0 %v1584
    %v1857 = vpop.f32.mrf.mxu0
    %v1858 = vadd.f32 %v1734, %v1857
    %1859 = vmatmul.f32.gmra.mxu0 %v1585
    %v1860 = vpop.f32.mrf.mxu0
    %v1861 = vadd.f32 %v1734, %v1860
    %1862 = vmatmul.f32.gmra.mxu0 %v1586
    %v1863 = vpop.f32.mrf.mxu0
    %v1864 = vadd.f32 %v1734, %v1863
    %1865 = vmatmul.f32.gmra.mxu0 %v1587
    %v1866 = vpop.f32.mrf.mxu0
    %v1867 = vadd.f32 %v1734, %v1866
    %1868 = vmatmul.f32.gmra.mxu0 %v1588
    %v1869 = vpop.f32.mrf.mxu0
    %v1870 = vadd.f32 %v1734, %v1869
    %1871 = vmatmul.f32.gmra.mxu0 %v1589
    %v1872 = vpop.f32.mrf.mxu0
    %v1873 = vadd.f32 %v1734, %v1872
    %1874 = vmatmul.f32.gmra.mxu0 %v1590
    %v1875 = vpop.f32.mrf.mxu0
    %v1876 = vadd.f32 %v1734, %v1875
    %1877 = vmatmul.f32.gmra.mxu0 %v1591
    %v1878 = vpop.f32.mrf.mxu0
    %v1879 = vadd.f32 %v1734, %v1878
    %1880 = vmatmul.f32.gmra.mxu0 %v1592
    %v1881 = vpop.f32.mrf.mxu0
    %v1882 = vadd.f32 %v1734, %v1881
    %1883 = vmatmul.f32.gmra.mxu0 %v1593
    %v1884 = vpop.f32.mrf.mxu0
    %v1885 = vadd.f32 %v1734, %v1884
    %1886 = vmatmul.f32.gmra.mxu0 %v1594
    %v1887 = vpop.f32.mrf.mxu0
    %v1888 = vadd.f32 %v1734, %v1887
    %1889 = vmatmul.f32.gmra.mxu0 %v1595
    %v1890 = vpop.f32.mrf.mxu0
    %v1891 = vadd.f32 %v1734, %v1890
    %1892 = vmatmul.f32.gmra.mxu0 %v1596
    %v1893 = vpop.f32.mrf.mxu0
    %v1894 = vadd.f32 %v1734, %v1893
    %1895 = vmatmul.f32.gmra.mxu0 %v1597
    %v1896 = vpop.f32.mrf.mxu0
    %v1897 = vadd.f32 %v1734, %v1896
    %1898 = vmatmul.f32.gmra.mxu0 %v1598
    %v1899 = vpop.f32.mrf.mxu0
    %v1900 = vadd.f32 %v1734, %v1899
    %1901 = vmatmul.f32.gmra.mxu0 %v1599
    %v1902 = vpop.f32.mrf.mxu0
    %v1903 = vadd.f32 %v1734, %v1902
    %1904 = vdwg.mxu0
    %v1905 = vmax.f32 %v1858, 0.0
    %v1906 = vmax.f32 %v1861, 0.0
    %v1907 = vmax.f32 %v1864, 0.0
    %v1908 = vmax.f32 %v1867, 0.0
    %v1909 = vmax.f32 %v1870, 0.0
    %v1910 = vmax.f32 %v1873, 0.0
    %v1911 = vmax.f32 %v1876, 0.0
    %v1912 = vmax.f32 %v1879, 0.0
    %v1913 = vmax.f32 %v1882, 0.0
    %v1914 = vmax.f32 %v1885, 0.0
    %v1915 = vmax.f32 %v1888, 0.0
    %v1916 = vmax.f32 %v1891, 0.0
    %v1917 = vmax.f32 %v1894, 0.0
    %v1918 = vmax.f32 %v1897, 0.0
    %v1919 = vmax.f32 %v1900, 0.0
    %v1920 = vmax.f32 %v1903, 0.0
    %1921 = vmatpush.msra.mxu0 %v1920
    %1922 = vmatpush.msra.mxu0 %v1919
    %1923 = vmatpush.msra.mxu0 %v1918
    %1924 = vmatpush.msra.mxu0 %v1917
    %1925 = vmatpush.msra.mxu0 %v1916
    %1926 = vmatpush.msra.mxu0 %v1915
    %1927 = vmatpush.msra.mxu0 %v1914
    %1928 = vmatpush.msra.mxu0 %v1913
    %1929 = vmatpush.msra.mxu0 %v1912
    %1930 = vmatpush.msra.mxu0 %v1911
    %1931 = vmatpush.msra.mxu0 %v1910
    %1932 = vmatpush.msra.mxu0 %v1909
    %1933 = vmatpush.msra.mxu0 %v1908
    %1934 = vmatpush.msra.mxu0 %v1907
    %1935 = vmatpush.msra.mxu0 %v1906
    %1936 = vmatpush.msra.mxu0 %v1905
    %1937 = vmatmul.f32.gmra.mxu0 %v1817
    %v1938 = vpop.f32.mrf.mxu0
    %v1939 = vadd.f32 0.0, %v1938
    %1940 = vdwg.mxu0
    %v1941 = vld [vmem:[%s6 + $0x10] sm:$0xff]
    %v1942 = vld [vmem:[%s6 + $0x18] sm:$0xff]
    %v1944 = vsel %vm1618, %v1939, 0
    %1946 = vmatpush.msra.mxu0 0.0
    %1947 = vmatpush.msra.mxu0 0.0
    %1948 = vmatpush.msra.mxu0 0.0
    %1949 = vmatpush.msra.mxu0 0.0
    %1950 = vmatpush.msra.mxu0 0.0
    %1951 = vmatpush.msra.mxu0 0.0
    %1952 = vmatpush.msra.mxu0 0.0
    %1953 = vmatpush.msra.mxu0 0.0
    %1954 = vmatpush.msra.mxu0 0.0
    %1955 = vmatpush.msra.mxu0 0.0
    %1956 = vmatpush.msra.mxu0 0.0
    %1957 = vmatpush.msra.mxu0 0.0
    %1958 = vmatpush.msra.mxu0 0.0
    %1959 = vmatpush.msra.mxu0 0.0
    %1960 = vmatpush.msra.mxu0 %v1942
    %1961 = vmatpush.msra.mxu0 %v1941
    %1962 = vmatmul.f32.gmra.mxu0 %v1944
    %v1963 = vpop.f32.mrf.mxu0
    %v1964 = vadd.f32 0.0, %v1963
    %1965 = vdwg.mxu0
    %v1967 = vsel %vm1618, %v1836, 0
    %1969 = vmatpush.msra.mxu0 0.0
    %1970 = vmatpush.msra.mxu0 0.0
    %1971 = vmatpush.msra.mxu0 0.0
    %1972 = vmatpush.msra.mxu0 0.0
    %1973 = vmatpush.msra.mxu0 0.0
    %1974 = vmatpush.msra.mxu0 0.0
    %1975 = vmatpush.msra.mxu0 0.0
    %1976 = vmatpush.msra.mxu0 0.0
    %1977 = vmatpush.msra.mxu0 0.0
    %1978 = vmatpush.msra.mxu0 0.0
    %1979 = vmatpush.msra.mxu0 0.0
    %1980 = vmatpush.msra.mxu0 0.0
    %1981 = vmatpush.msra.mxu0 0.0
    %1982 = vmatpush.msra.mxu0 0.0
    %1983 = vmatpush.msra.mxu0 %v1839
    %1984 = vmatpush.msra.mxu0 %v1838
    %1985 = vmatmul.f32.gmra.mxu0 %v1967
    %v1986 = vpop.f32.mrf.mxu0
    %v1987 = vadd.f32 %v1964, %v1986
    %1988 = vdwg.mxu0
    %v1989 = vld [vmem:[%s7] sm:$0x1]
    %v1991 = vperm.slane %v1989, 0
    %v1993 = vadd.f32 %v1987, %v1991
    %v1994 = vmax.f32 %v1993, 0.0
    %v1995 = vld [vmem:[%s8] sm:$0xff]
    %v1996 = vld [vmem:[%s8 + $0x8] sm:$0xff]
    %v1997 = vld [vmem:[%s9] sm:$0x1]
    %v1999 = vperm.slane %v1997, 0
    %v2002 = vsel %vm1618, %v1994, 0
    %2004 = vmatpush.msra.mxu0 0.0
    %2005 = vmatpush.msra.mxu0 0.0
    %2006 = vmatpush.msra.mxu0 0.0
    %2007 = vmatpush.msra.mxu0 0.0
    %2008 = vmatpush.msra.mxu0 0.0
    %2009 = vmatpush.msra.mxu0 0.0
    %2010 = vmatpush.msra.mxu0 0.0
    %2011 = vmatpush.msra.mxu0 0.0
    %2012 = vmatpush.msra.mxu0 0.0
    %2013 = vmatpush.msra.mxu0 0.0
    %2014 = vmatpush.msra.mxu0 0.0
    %2015 = vmatpush.msra.mxu0 0.0
    %2016 = vmatpush.msra.mxu0 0.0
    %2017 = vmatpush.msra.mxu0 0.0
    %2018 = vmatpush.msra.mxu0 %v1996
    %2019 = vmatpush.msra.mxu0 %v1995
    %2020 = vmatmul.f32.gmra.mxu0 %v2002
    %v2021 = vpop.f32.mrf.mxu0
    %v2022 = vadd.f32 %v1999, %v2021
    %2023 = vdwg.mxu0
    %vm2024 = vcmask 23552
    %2025 = vst.msk [vmem:[%s11] sm:$0xff] %vm2024, %v2022
    %v2026 = vsel %vm2024, %v2022, -inf
    %2027 = vmax.xlane.f32.xlu0 %v2026
    %v2028 = vpop.xlane.xlu0 %2027
    %v2029 = vsub.f32 %v2022, %v2028
    %v2030 = vmul.f32 %v2029, 1.442695
    %v2031 = vpow.pop %v2030
    %v2032 = vsel %vm2024, %v2031, 0.0
    %2033 = vadd.xlane.f32.xlu0 %v2032
    %v2034 = vpop.xlane.xlu0 %2033
    %v2035 = vlog2.pop %v2034
    %v2036 = vmul.f32 %v2035, 0.6931472
    %v2037 = vadd.f32 %v2028, %v2036
    %v2038 = vld [vmem:[%s10] sm:$0xff]
    %v2039 = vmul.f32 %v2022, %v2038
    %v2040 = vsel %vm2024, %v2039, 0.0
    %2041 = vadd.xlane.f32.xlu0 %v2040
    %v2042 = vpop.xlane.xlu0 %2041
    %v2043 = vsub.f32 %v2037, %v2042
    %v2044 = vrot.slane %v2043, 4
    %v2045 = vadd.f32 %v2043, %v2044
    %v2046 = vrot.slane %v2045, 2
    %v2047 = vadd.f32 %v2045, %v2046
    %v2048 = vrot.slane %v2047, 1
    %v2049 = vadd.f32 %v2047, %v2048
    %v2050 = vrcp.pop 8.0
    %v2051 = vmul.f32 8.0, %v2050
    %v2052 = vsub.f32 1.0, %v2051
    %v2053 = vmul.f32 %v2050, %v2052
    %v2054 = vadd.f32 %v2050, %v2053
    %vm2055 = vweird.f32 %v2050
    %v2056 = vsel %vm2055, %v2050, %v2054
    %v2057 = vmul.f32 %v2049, %v2056
    %vm2058 = vcmask 0
    %2059 = vst.msk [vmem:[#allocation7] sm:$0x1] %vm2058, %v2057
    // Predicated region
    $region54: #{gtn_forward.1} parent=1 // pred_check
      _
    $region55: #{gtn_forward.1} parent=1 // pred_check_branch
      %2061 = sbr.rel (0) target = $region57
    $region56: #{gtn_forward.1} parent=1 // pred_region
      _
    $region57: #{gtn_forward.1} parent=1 // pred_fallthru
      _
    // Predicated region
    $region58: #{gtn_forward.1} parent=1 // pred_check
      _
    $region59: #{gtn_forward.1} parent=1 // pred_check_branch
      %2063 = sbr.rel (0) target = $region61
    $region60: #{gtn_forward.1} parent=1 // pred_region
      %2065 = vsyncadd [#allocation4], 0
      %s2067 = sshll.u32 [#allocation7], 4
      %s2068 = int_to_ptr.vmem [resolvable:$true] %s2067
      %s2069 = sshll.u32 %s12, 4
      %s2070 = int_to_ptr.hbm [resolvable:$true] %s2069
      %2072 = dma.vmem_to_hbm [thread:$0]  %s2068, 16, %s2070, [#allocation4]
    $region61: #{gtn_forward.1} parent=1 // pred_fallthru
      _
    // Predicated region
    $region62: #{gtn_forward.1} parent=1 // pred_check
      _
    $region63: #{gtn_forward.1} parent=1 // pred_check_branch
      %2074 = sbr.rel (0) target = $region65
    $region64: #{gtn_forward.1} parent=1 // pred_region
      _
    $region65: #{gtn_forward.1} parent=1 // pred_fallthru
      _
    // Predicated region
    $region66: #{gtn_forward.1} parent=1 // pred_check
      _
    $region67: #{gtn_forward.1} parent=1 // pred_check_branch
      %2076 = sbr.rel (0) target = $region69
    $region68: #{gtn_forward.1} parent=1 // pred_region
      %2078 = dma.done [#allocation4], 16
    $region69: #{gtn_forward.1} parent=1 // pred_fallthru
      _
    %2079 = vsyncpa [#allocation3], 1
    %2080 = vsyncpa [#allocation4], 1
    %2081 = vsyncpa [#allocation5], 1

</llo_original>
